<compile_context>
chip_gen: v6e
topology: v6e:2x2x1
jax: 0.10.0
libtpu: 0.0.40
codegen_flags: <defaults>
</compile_context>

<pallas_src>
import functools

import jax
import jax.numpy as jnp
from jax.experimental import pallas as pl
from jax.experimental.pallas import tpu as pltpu

_EPS = 1e-5


def _dense_kernel(x_ref,
                  g1a_ref, be1a_ref, w1a_ref, b1a_ref,
                  g1b_ref, be1b_ref,
                  w1c0_ref, w1c1_ref, w1c2_ref, b1c_ref,
                  g2ax_ref, be2ax_ref, g2al_ref, be2al_ref,
                  w2ax_ref, w2al_ref, b2a_ref,
                  g2b_ref, be2b_ref,
                  w2c0_ref, w2c1_ref, w2c2_ref, b2c_ref,
                  lay1_ref, lay2_ref,
                  *, n_valid, seq_len):
    x = x_ref[...]                       # (C_in, R_pad), R_pad % 128 == 0
    r_pad = x.shape[1]
    inv_n = 1.0 / n_valid

    # Per-column masks built in-kernel (no HBM traffic, a few VPU ops).
    idx = jax.lax.broadcasted_iota(jnp.int32, (1, r_pad), 1)
    pos = idx % seq_len
    valid = (idx < n_valid).astype(jnp.float32)            # 0 on lane padding
    mask_first = (pos != 0).astype(jnp.float32)            # 0 at per-sample l == 0
    mask_last = (pos != seq_len - 1).astype(jnp.float32)   # 0 at per-sample l == L-1

    def moments(h):
        # Two-pass (mean-shifted) batch statistics over valid lanes only:
        # avoids E[x^2]-E[x]^2 cancellation and ignores lane padding.
        mean = jnp.sum(h * valid, axis=1, keepdims=True) * inv_n
        d = (h - mean) * valid
        var = jnp.sum(d * d, axis=1, keepdims=True) * inv_n
        return mean, var

    def bn_relu(h, mean, var, gamma, beta):
        # BatchNorm folded into one per-channel scale/shift + ReLU.
        scale = gamma * jax.lax.rsqrt(var + _EPS)
        shift = beta - mean * scale
        return jnp.maximum(h * scale + shift, 0.0)

    def conv3(h, w0, w1, w2, b):
        # conv1d(k=3, pad=1): three accumulating matmuls against lane-rolled
        # activations.  Rolls run on the XLU; per-sample boundaries (and the
        # roll wrap-around) are killed by the masks, so no padded scratch.
        h_prev = pltpu.roll(h, shift=1, axis=1) * mask_first
        h_next = pltpu.roll(h, shift=r_pad - 1, axis=1) * mask_last
        y = jnp.dot(w1, h, preferred_element_type=jnp.float32)
        y = y + jnp.dot(w0, h_prev, preferred_element_type=jnp.float32)
        y = y + jnp.dot(w2, h_next, preferred_element_type=jnp.float32)
        return y + b

    # ---- layer1: BN -> ReLU -> Conv1x1 -> BN -> ReLU -> Conv3(pad=1) ----
    mean_x, var_x = moments(x)
    h = bn_relu(x, mean_x, var_x, g1a_ref[...], be1a_ref[...])
    h = jnp.dot(w1a_ref[...], h, preferred_element_type=jnp.float32) + b1a_ref[...]
    m, v = moments(h)
    h = bn_relu(h, m, v, g1b_ref[...], be1b_ref[...])
    lay1 = conv3(h, w1c0_ref[...], w1c1_ref[...], w1c2_ref[...], b1c_ref[...])
    lay1_ref[...] = lay1

    # ---- layer2 on concat([x, lay1]): split per channel group, reuse x stats ----
    hx = bn_relu(x, mean_x, var_x, g2ax_ref[...], be2ax_ref[...])
    mean_l, var_l = moments(lay1)
    hl = bn_relu(lay1, mean_l, var_l, g2al_ref[...], be2al_ref[...])
    h2 = (jnp.dot(w2ax_ref[...], hx, preferred_element_type=jnp.float32)
          + jnp.dot(w2al_ref[...], hl, preferred_element_type=jnp.float32)
          + b2a_ref[...])
    m, v = moments(h2)
    h2 = bn_relu(h2, m, v, g2b_ref[...], be2b_ref[...])
    lay2_ref[...] = conv3(h2, w2c0_ref[...], w2c1_ref[...], w2c2_ref[...], b2c_ref[...])


def init_params(key, in_features, out_features):
    """Deterministic synthetic parameters, PyTorch weight conventions:
       conv1x1 weight (O, C), conv3 weight (O, C, 3), biases (O,), BN gamma/beta (C,)."""
    o = out_features
    c1 = in_features
    c2 = in_features + out_features
    ks = jax.random.split(key, 16)

    def conv_w(k, out_c, in_c, ksz=None):
        shape = (out_c, in_c) if ksz is None else (out_c, in_c, ksz)
        fan_in = in_c * (1 if ksz is None else ksz)
        bound = 1.0 / jnp.sqrt(jnp.float32(fan_in))
        return jax.random.uniform(k, shape, jnp.float32, -bound, bound)

    def bn_params(kg, kb, c):
        gamma = 1.0 + 0.1 * jax.random.normal(kg, (c,), jnp.float32)
        beta = 0.1 * jax.random.normal(kb, (c,), jnp.float32)
        return gamma, beta

    g1a, b1a = bn_params(ks[0], ks[1], c1)
    g1b, b1b = bn_params(ks[2], ks[3], o)
    g2a, b2a = bn_params(ks[4], ks[5], c2)
    g2b, b2b = bn_params(ks[6], ks[7], o)

    return {
        "l1": {
            "bn1_g": g1a, "bn1_b": b1a,
            "w1": conv_w(ks[8], o, c1), "b1": 0.05 * jax.random.normal(ks[9], (o,), jnp.float32),
            "bn2_g": g1b, "bn2_b": b1b,
            "w3": conv_w(ks[10], o, o, 3), "b3": 0.05 * jax.random.normal(ks[11], (o,), jnp.float32),
        },
        "l2": {
            "bn1_g": g2a, "bn1_b": b2a,
            "w1": conv_w(ks[12], o, c2), "b1": 0.05 * jax.random.normal(ks[13], (o,), jnp.float32),
            "bn2_g": g2b, "bn2_b": b2b,
            "w3": conv_w(ks[14], o, o, 3), "b3": 0.05 * jax.random.normal(ks[15], (o,), jnp.float32),
        },
    }


def blond_dense_layer_forward(x_ncl, params):
    """x_ncl: (N, C_in, L) float32.  Returns (N, C_in + 2*out_features, L)."""
    n, c_in, length = x_ncl.shape
    o = params["l1"]["w1"].shape[0]
    rows = n * length
    r_pad = max(128, ((rows + 127) // 128) * 128)   # lane-dense width

    # channels-first row matrix: column index = n*L + l  (L contiguous, on lanes)
    x_cr = jnp.transpose(x_ncl, (1, 0, 2)).reshape(c_in, rows).astype(jnp.float32)
    x_in = x_cr if r_pad == rows else jnp.pad(x_cr, ((0, 0), (0, r_pad - rows)))

    def col(v):          # (C,) -> (C, 1): per-channel column broadcast over lanes
        return v.reshape(-1, 1).astype(jnp.float32)

    p1, p2 = params["l1"], params["l2"]
    inputs = [
        x_in,
        col(p1["bn1_g"]), col(p1["bn1_b"]),
        p1["w1"].astype(jnp.float32), col(p1["b1"]),
        col(p1["bn2_g"]), col(p1["bn2_b"]),
        p1["w3"][:, :, 0].astype(jnp.float32),
        p1["w3"][:, :, 1].astype(jnp.float32),
        p1["w3"][:, :, 2].astype(jnp.float32), col(p1["b3"]),
        col(p2["bn1_g"][:c_in]), col(p2["bn1_b"][:c_in]),
        col(p2["bn1_g"][c_in:]), col(p2["bn1_b"][c_in:]),
        p2["w1"][:, :c_in].astype(jnp.float32),
        p2["w1"][:, c_in:].astype(jnp.float32),
        col(p2["b1"]),
        col(p2["bn2_g"]), col(p2["bn2_b"]),
        p2["w3"][:, :, 0].astype(jnp.float32),
        p2["w3"][:, :, 1].astype(jnp.float32),
        p2["w3"][:, :, 2].astype(jnp.float32), col(p2["b3"]),
    ]

    # Shape-derived VMEM budget (single-shot path); generous but capped below
    # physical on every generation.  See TODO(synk) at top for the tiled path.
    c_total = c_in + 2 * o
    row_bytes = r_pad * 4
    est = (2 * c_in + 2 * c_total + 12 * o) * row_bytes + (4 << 20)
    vmem_limit = int(min(96 * 1024 * 1024, max(32 * 1024 * 1024, 2 * est)))

    vmem = pl.BlockSpec(memory_space=pltpu.MemorySpace.VMEM)
    kern = functools.partial(_dense_kernel, n_valid=rows, seq_len=length)
    lay1_cr, lay2_cr = pl.pallas_call(
        kern,
        out_shape=(jax.ShapeDtypeStruct((o, r_pad), jnp.float32),
                   jax.ShapeDtypeStruct((o, r_pad), jnp.float32)),
        in_specs=[vmem] * len(inputs),
        out_specs=(vmem, vmem),
        compiler_params=pltpu.CompilerParams(vmem_limit_bytes=vmem_limit),
    )(*inputs)

    # Single channels-first concat (reusing the already-transposed x) + one
    # transpose back to NCL: fewer wrapper HBM passes than per-array transposes.
    out_cr = jnp.concatenate(
        [x_cr, lay1_cr[:, :rows], lay2_cr[:, :rows]], axis=0)
    return out_cr.reshape(c_total, n, length).transpose(1, 0, 2)


def reference_forward(x, params):
    """Pure-JAX NCL reference mirroring the PyTorch module."""
    def bn_relu(h, g, b):
        mean = h.mean(axis=(0, 2), keepdims=True)
        var = ((h - mean) ** 2).mean(axis=(0, 2), keepdims=True)
        hn = (h - mean) / jnp.sqrt(var + _EPS)
        return jnp.maximum(hn * g[None, :, None] + b[None, :, None], 0.0)

    def conv1x1(h, w, b):  # w: (O, C)
        return jnp.einsum("ncl,oc->nol", h, w) + b[None, :, None]

    def conv3(h, w, b):  # w: (O, C, 3), padding=1
        hp = jnp.pad(h, ((0, 0), (0, 0), (1, 1)))
        length = h.shape[2]
        y = sum(jnp.einsum("ncl,oc->nol", hp[:, :, k:k + length], w[:, :, k]) for k in range(3))
        return y + b[None, :, None]

    def layer(h, p):
        h = bn_relu(h, p["bn1_g"], p["bn1_b"])
        h = conv1x1(h, p["w1"], p["b1"])
        h = bn_relu(h, p["bn2_g"], p["bn2_b"])
        return conv3(h, p["w3"], p["b3"])

    lay1 = layer(x, params["l1"])
    x1 = jnp.concatenate([x, lay1], axis=1)
    lay2 = layer(x1, params["l2"])
    return jnp.concatenate([x, lay1, lay2], axis=1)


if __name__ == "__main__":
    key = jax.random.PRNGKey(0)
    C_IN, OUT_FEATURES = 4, 8

    # Case 1: tiny shapes implied by the module spec (R padded 32 -> 128).
    N, L = 2, 16
    k_x, k_p, key = jax.random.split(key, 3)
    x = jax.random.normal(k_x, (N, C_IN, L), jnp.float32)
    params = init_params(k_p, C_IN, OUT_FEATURES)
    out = jax.block_until_ready(blond_dense_layer_forward(x, params))
    ref = reference_forward(x, params)
    assert out.shape == (N, C_IN + 2 * OUT_FEATURES, L), out.shape
    err = float(jnp.max(jnp.abs(out - ref)))
    assert err < 2e-3, err

    # Case 2: multi-vreg lanes, L not a multiple of 128, padded tail masked.
    N2, L2 = 4, 300
    k_x2, k_p2 = jax.random.split(key)
    x2 = jax.random.normal(k_x2, (N2, C_IN, L2), jnp.float32)
    params2 = init_params(k_p2, C_IN, OUT_FEATURES)
    out2 = jax.block_until_ready(blond_dense_layer_forward(x2, params2))
    ref2 = reference_forward(x2, params2)
    assert out2.shape == (N2, C_IN + 2 * OUT_FEATURES, L2), out2.shape
    err2 = float(jnp.max(jnp.abs(out2 - ref2)))
    assert err2 < 2e-3, err2

    print("KERNEL_OK")
</pallas_src>

<mosaic_0001>
module attributes {stable_mosaic.version = 11 : i64} {
  func.func @_dense_kernel(%arg0: memref<4x128xf32, #tpu.memory_space<vmem>>, %arg1: memref<4x1xf32, #tpu.memory_space<vmem>>, %arg2: memref<4x1xf32, #tpu.memory_space<vmem>>, %arg3: memref<8x4xf32, #tpu.memory_space<vmem>>, %arg4: memref<8x1xf32, #tpu.memory_space<vmem>>, %arg5: memref<8x1xf32, #tpu.memory_space<vmem>>, %arg6: memref<8x1xf32, #tpu.memory_space<vmem>>, %arg7: memref<8x8xf32, #tpu.memory_space<vmem>>, %arg8: memref<8x8xf32, #tpu.memory_space<vmem>>, %arg9: memref<8x8xf32, #tpu.memory_space<vmem>>, %arg10: memref<8x1xf32, #tpu.memory_space<vmem>>, %arg11: memref<4x1xf32, #tpu.memory_space<vmem>>, %arg12: memref<4x1xf32, #tpu.memory_space<vmem>>, %arg13: memref<8x1xf32, #tpu.memory_space<vmem>>, %arg14: memref<8x1xf32, #tpu.memory_space<vmem>>, %arg15: memref<8x4xf32, #tpu.memory_space<vmem>>, %arg16: memref<8x8xf32, #tpu.memory_space<vmem>>, %arg17: memref<8x1xf32, #tpu.memory_space<vmem>>, %arg18: memref<8x1xf32, #tpu.memory_space<vmem>>, %arg19: memref<8x1xf32, #tpu.memory_space<vmem>>, %arg20: memref<8x8xf32, #tpu.memory_space<vmem>>, %arg21: memref<8x8xf32, #tpu.memory_space<vmem>>, %arg22: memref<8x8xf32, #tpu.memory_space<vmem>>, %arg23: memref<8x1xf32, #tpu.memory_space<vmem>>, %arg24: memref<8x128xf32, #tpu.memory_space<vmem>>, %arg25: memref<8x128xf32, #tpu.memory_space<vmem>>) attributes {dimension_semantics = [], scalar_prefetch = 0 : i64, scratch_operands = 0 : i64, tpu.core_type = #tpu.core_type<tc>} {
    %c0 = arith.constant 0 : index
    %c0_0 = arith.constant 0 : index
    %0 = vector.load %arg0[%c0, %c0_0] : memref<4x128xf32, #tpu.memory_space<vmem>>, vector<4x128xf32>
    %1 = tpu.iota {dimensions = array<i32: 1>} : vector<1x128xi32>
    %c16_i32 = arith.constant 16 : i32
    %c0_i32 = arith.constant 0 : i32
    %2 = arith.cmpi eq, %c16_i32, %c0_i32 : i32
    %c1_i32 = arith.constant 1 : i32
    %3 = arith.select %2, %c1_i32, %c16_i32 : i32
    %4 = vector.broadcast %3 : i32 to vector<1x128xi32>
    %5 = arith.remsi %1, %4 : vector<1x128xi32>
    %c0_i32_1 = arith.constant 0 : i32
    %6 = vector.broadcast %c0_i32_1 : i32 to vector<1x128xi32>
    %7 = arith.cmpi ne, %5, %6 : vector<1x128xi32>
    %c0_i32_2 = arith.constant 0 : i32
    %8 = vector.broadcast %c0_i32_2 : i32 to vector<1x128xi32>
    %9 = arith.cmpi slt, %5, %8 : vector<1x128xi32>
    %c0_i32_3 = arith.constant 0 : i32
    %10 = arith.cmpi slt, %3, %c0_i32_3 : i32
    %11 = vector.broadcast %10 : i1 to vector<1x128xi1>
    %12 = vector.broadcast %11 : vector<1x128xi1> to vector<1x128xi1>
    %13 = arith.xori %9, %12 : vector<1x128xi1>
    %14 = arith.andi %13, %7 : vector<1x128xi1>
    %15 = vector.broadcast %3 : i32 to vector<1x128xi32>
    %16 = arith.addi %5, %15 : vector<1x128xi32>
    %17 = arith.select %14, %16, %5 : vector<1x128xi1>, vector<1x128xi32>
    %c32_i32 = arith.constant 32 : i32
    %18 = vector.broadcast %c32_i32 : i32 to vector<1x128xi32>
    %19 = arith.cmpi slt, %1, %18 : vector<1x128xi32>
    %20 = arith.extui %19 : vector<1x128xi1> to vector<1x128xi32>
    %21 = arith.sitofp %20 : vector<1x128xi32> to vector<1x128xf32>
    %c0_i32_4 = arith.constant 0 : i32
    %22 = vector.broadcast %c0_i32_4 : i32 to vector<1x128xi32>
    %23 = arith.cmpi ne, %17, %22 : vector<1x128xi32>
    %24 = arith.extui %23 : vector<1x128xi1> to vector<1x128xi32>
    %25 = arith.sitofp %24 : vector<1x128xi32> to vector<1x128xf32>
    %c15_i32 = arith.constant 15 : i32
    %26 = vector.broadcast %c15_i32 : i32 to vector<1x128xi32>
    %27 = arith.cmpi ne, %17, %26 : vector<1x128xi32>
    %28 = arith.extui %27 : vector<1x128xi1> to vector<1x128xi32>
    %29 = arith.sitofp %28 : vector<1x128xi32> to vector<1x128xf32>
    %30 = vector.broadcast %21 : vector<1x128xf32> to vector<4x128xf32>
    %31 = arith.mulf %0, %30 : vector<4x128xf32>
    %cst = arith.constant dense<0.000000e+00> : vector<4xf32>
    %32 = vector.multi_reduction <add>, %31, %cst [1] : vector<4x128xf32> to vector<4xf32>
    %33 = vector.shape_cast %32 : vector<4xf32> to vector<4x1xf32>
    %cst_5 = arith.constant 3.125000e-02 : f32
    %34 = vector.broadcast %cst_5 : f32 to vector<4x1xf32>
    %35 = arith.mulf %33, %34 : vector<4x1xf32>
    %36 = vector.broadcast %35 : vector<4x1xf32> to vector<4x128xf32>
    %37 = arith.subf %0, %36 : vector<4x128xf32>
    %38 = vector.broadcast %21 : vector<1x128xf32> to vector<4x128xf32>
    %39 = arith.mulf %37, %38 : vector<4x128xf32>
    %40 = arith.mulf %39, %39 : vector<4x128xf32>
    %cst_6 = arith.constant dense<0.000000e+00> : vector<4xf32>
    %41 = vector.multi_reduction <add>, %40, %cst_6 [1] : vector<4x128xf32> to vector<4xf32>
    %42 = vector.shape_cast %41 : vector<4xf32> to vector<4x1xf32>
    %cst_7 = arith.constant 3.125000e-02 : f32
    %43 = vector.broadcast %cst_7 : f32 to vector<4x1xf32>
    %44 = arith.mulf %42, %43 : vector<4x1xf32>
    %c0_8 = arith.constant 0 : index
    %c0_9 = arith.constant 0 : index
    %45 = vector.load %arg1[%c0_8, %c0_9] : memref<4x1xf32, #tpu.memory_space<vmem>>, vector<4x1xf32>
    %c0_10 = arith.constant 0 : index
    %c0_11 = arith.constant 0 : index
    %46 = vector.load %arg2[%c0_10, %c0_11] : memref<4x1xf32, #tpu.memory_space<vmem>>, vector<4x1xf32>
    %cst_12 = arith.constant 9.99999974E-6 : f32
    %47 = vector.broadcast %cst_12 : f32 to vector<4x1xf32>
    %48 = arith.addf %44, %47 : vector<4x1xf32>
    %49 = math.rsqrt %48 : vector<4x1xf32>
    %50 = arith.mulf %45, %49 : vector<4x1xf32>
    %51 = arith.mulf %35, %50 : vector<4x1xf32>
    %52 = arith.subf %46, %51 : vector<4x1xf32>
    %53 = vector.broadcast %50 : vector<4x1xf32> to vector<4x128xf32>
    %54 = arith.mulf %0, %53 : vector<4x128xf32>
    %55 = vector.broadcast %52 : vector<4x1xf32> to vector<4x128xf32>
    %56 = arith.addf %54, %55 : vector<4x128xf32>
    %cst_13 = arith.constant 0.000000e+00 : f32
    %57 = vector.broadcast %cst_13 : f32 to vector<4x128xf32>
    %58 = arith.maximumf %56, %57 : vector<4x128xf32>
    %c0_14 = arith.constant 0 : index
    %c0_15 = arith.constant 0 : index
    %59 = vector.load %arg3[%c0_14, %c0_15] : memref<8x4xf32, #tpu.memory_space<vmem>>, vector<8x4xf32>
    %cst_16 = arith.constant dense<0.000000e+00> : vector<8x128xf32>
    %60 = tpu.matmul %59, %58, %cst_16 {dimension_numbers = #tpu.dot_dimension_numbers<[1], [0], [0], [1], [0, 0, 1, 1], [], []>} : vector<8x4xf32>, vector<4x128xf32>, vector<8x128xf32> -> vector<8x128xf32>
    %c0_17 = arith.constant 0 : index
    %c0_18 = arith.constant 0 : index
    %61 = vector.load %arg4[%c0_17, %c0_18] : memref<8x1xf32, #tpu.memory_space<vmem>>, vector<8x1xf32>
    %62 = vector.broadcast %61 : vector<8x1xf32> to vector<8x128xf32>
    %63 = arith.addf %60, %62 : vector<8x128xf32>
    %64 = vector.broadcast %21 : vector<1x128xf32> to vector<8x128xf32>
    %65 = arith.mulf %63, %64 : vector<8x128xf32>
    %cst_19 = arith.constant dense<0.000000e+00> : vector<8xf32>
    %66 = vector.multi_reduction <add>, %65, %cst_19 [1] : vector<8x128xf32> to vector<8xf32>
    %67 = vector.shape_cast %66 : vector<8xf32> to vector<8x1xf32>
    %cst_20 = arith.constant 3.125000e-02 : f32
    %68 = vector.broadcast %cst_20 : f32 to vector<8x1xf32>
    %69 = arith.mulf %67, %68 : vector<8x1xf32>
    %70 = vector.broadcast %69 : vector<8x1xf32> to vector<8x128xf32>
    %71 = arith.subf %63, %70 : vector<8x128xf32>
    %72 = vector.broadcast %21 : vector<1x128xf32> to vector<8x128xf32>
    %73 = arith.mulf %71, %72 : vector<8x128xf32>
    %74 = arith.mulf %73, %73 : vector<8x128xf32>
    %cst_21 = arith.constant dense<0.000000e+00> : vector<8xf32>
    %75 = vector.multi_reduction <add>, %74, %cst_21 [1] : vector<8x128xf32> to vector<8xf32>
    %76 = vector.shape_cast %75 : vector<8xf32> to vector<8x1xf32>
    %cst_22 = arith.constant 3.125000e-02 : f32
    %77 = vector.broadcast %cst_22 : f32 to vector<8x1xf32>
    %78 = arith.mulf %76, %77 : vector<8x1xf32>
    %c0_23 = arith.constant 0 : index
    %c0_24 = arith.constant 0 : index
    %79 = vector.load %arg5[%c0_23, %c0_24] : memref<8x1xf32, #tpu.memory_space<vmem>>, vector<8x1xf32>
    %c0_25 = arith.constant 0 : index
    %c0_26 = arith.constant 0 : index
    %80 = vector.load %arg6[%c0_25, %c0_26] : memref<8x1xf32, #tpu.memory_space<vmem>>, vector<8x1xf32>
    %cst_27 = arith.constant 9.99999974E-6 : f32
    %81 = vector.broadcast %cst_27 : f32 to vector<8x1xf32>
    %82 = arith.addf %78, %81 : vector<8x1xf32>
    %83 = math.rsqrt %82 : vector<8x1xf32>
    %84 = arith.mulf %79, %83 : vector<8x1xf32>
    %85 = arith.mulf %69, %84 : vector<8x1xf32>
    %86 = arith.subf %80, %85 : vector<8x1xf32>
    %87 = vector.broadcast %84 : vector<8x1xf32> to vector<8x128xf32>
    %88 = arith.mulf %63, %87 : vector<8x128xf32>
    %89 = vector.broadcast %86 : vector<8x1xf32> to vector<8x128xf32>
    %90 = arith.addf %88, %89 : vector<8x128xf32>
    %cst_28 = arith.constant 0.000000e+00 : f32
    %91 = vector.broadcast %cst_28 : f32 to vector<8x128xf32>
    %92 = arith.maximumf %90, %91 : vector<8x128xf32>
    %c0_29 = arith.constant 0 : index
    %c0_30 = arith.constant 0 : index
    %93 = vector.load %arg7[%c0_29, %c0_30] : memref<8x8xf32, #tpu.memory_space<vmem>>, vector<8x8xf32>
    %c0_31 = arith.constant 0 : index
    %c0_32 = arith.constant 0 : index
    %94 = vector.load %arg8[%c0_31, %c0_32] : memref<8x8xf32, #tpu.memory_space<vmem>>, vector<8x8xf32>
    %c0_33 = arith.constant 0 : index
    %c0_34 = arith.constant 0 : index
    %95 = vector.load %arg9[%c0_33, %c0_34] : memref<8x8xf32, #tpu.memory_space<vmem>>, vector<8x8xf32>
    %c0_35 = arith.constant 0 : index
    %c0_36 = arith.constant 0 : index
    %96 = vector.load %arg10[%c0_35, %c0_36] : memref<8x1xf32, #tpu.memory_space<vmem>>, vector<8x1xf32>
    %c1_i32_37 = arith.constant 1 : i32
    %97 = tpu.dynamic_rotate %92 by %c1_i32_37 dim 1 : vector<8x128xf32>, i32 -> vector<8x128xf32>
    %98 = vector.broadcast %25 : vector<1x128xf32> to vector<8x128xf32>
    %99 = arith.mulf %97, %98 : vector<8x128xf32>
    %c127_i32 = arith.constant 127 : i32
    %100 = tpu.dynamic_rotate %92 by %c127_i32 dim 1 : vector<8x128xf32>, i32 -> vector<8x128xf32>
    %101 = vector.broadcast %29 : vector<1x128xf32> to vector<8x128xf32>
    %102 = arith.mulf %100, %101 : vector<8x128xf32>
    %cst_38 = arith.constant dense<0.000000e+00> : vector<8x128xf32>
    %103 = tpu.matmul %94, %92, %cst_38 {dimension_numbers = #tpu.dot_dimension_numbers<[1], [0], [0], [1], [0, 0, 1, 1], [], []>} : vector<8x8xf32>, vector<8x128xf32>, vector<8x128xf32> -> vector<8x128xf32>
    %cst_39 = arith.constant dense<0.000000e+00> : vector<8x128xf32>
    %104 = tpu.matmul %93, %99, %cst_39 {dimension_numbers = #tpu.dot_dimension_numbers<[1], [0], [0], [1], [0, 0, 1, 1], [], []>} : vector<8x8xf32>, vector<8x128xf32>, vector<8x128xf32> -> vector<8x128xf32>
    %105 = arith.addf %103, %104 : vector<8x128xf32>
    %cst_40 = arith.constant dense<0.000000e+00> : vector<8x128xf32>
    %106 = tpu.matmul %95, %102, %cst_40 {dimension_numbers = #tpu.dot_dimension_numbers<[1], [0], [0], [1], [0, 0, 1, 1], [], []>} : vector<8x8xf32>, vector<8x128xf32>, vector<8x128xf32> -> vector<8x128xf32>
    %107 = arith.addf %105, %106 : vector<8x128xf32>
    %108 = vector.broadcast %96 : vector<8x1xf32> to vector<8x128xf32>
    %109 = arith.addf %107, %108 : vector<8x128xf32>
    %c0_41 = arith.constant 0 : index
    %c0_42 = arith.constant 0 : index
    %110 = vector.load %arg24[%c0_41, %c0_42] : memref<8x128xf32, #tpu.memory_space<vmem>>, vector<8x128xf32>
    tpu.vector_store %arg24[%c0_41, %c0_42], %109 {strides = array<i32>} : memref<8x128xf32, #tpu.memory_space<vmem>>, vector<8x128xf32>,
    %c0_43 = arith.constant 0 : index
    %c0_44 = arith.constant 0 : index
    %111 = vector.load %arg11[%c0_43, %c0_44] : memref<4x1xf32, #tpu.memory_space<vmem>>, vector<4x1xf32>
    %c0_45 = arith.constant 0 : index
    %c0_46 = arith.constant 0 : index
    %112 = vector.load %arg12[%c0_45, %c0_46] : memref<4x1xf32, #tpu.memory_space<vmem>>, vector<4x1xf32>
    %cst_47 = arith.constant 9.99999974E-6 : f32
    %113 = vector.broadcast %cst_47 : f32 to vector<4x1xf32>
    %114 = arith.addf %44, %113 : vector<4x1xf32>
    %115 = math.rsqrt %114 : vector<4x1xf32>
    %116 = arith.mulf %111, %115 : vector<4x1xf32>
    %117 = arith.mulf %35, %116 : vector<4x1xf32>
    %118 = arith.subf %112, %117 : vector<4x1xf32>
    %119 = vector.broadcast %116 : vector<4x1xf32> to vector<4x128xf32>
    %120 = arith.mulf %0, %119 : vector<4x128xf32>
    %121 = vector.broadcast %118 : vector<4x1xf32> to vector<4x128xf32>
    %122 = arith.addf %120, %121 : vector<4x128xf32>
    %cst_48 = arith.constant 0.000000e+00 : f32
    %123 = vector.broadcast %cst_48 : f32 to vector<4x128xf32>
    %124 = arith.maximumf %122, %123 : vector<4x128xf32>
    %125 = vector.broadcast %21 : vector<1x128xf32> to vector<8x128xf32>
    %126 = arith.mulf %109, %125 : vector<8x128xf32>
    %cst_49 = arith.constant dense<0.000000e+00> : vector<8xf32>
    %127 = vector.multi_reduction <add>, %126, %cst_49 [1] : vector<8x128xf32> to vector<8xf32>
    %128 = vector.shape_cast %127 : vector<8xf32> to vector<8x1xf32>
    %cst_50 = arith.constant 3.125000e-02 : f32
    %129 = vector.broadcast %cst_50 : f32 to vector<8x1xf32>
    %130 = arith.mulf %128, %129 : vector<8x1xf32>
    %131 = vector.broadcast %130 : vector<8x1xf32> to vector<8x128xf32>
    %132 = arith.subf %109, %131 : vector<8x128xf32>
    %133 = vector.broadcast %21 : vector<1x128xf32> to vector<8x128xf32>
    %134 = arith.mulf %132, %133 : vector<8x128xf32>
    %135 = arith.mulf %134, %134 : vector<8x128xf32>
    %cst_51 = arith.constant dense<0.000000e+00> : vector<8xf32>
    %136 = vector.multi_reduction <add>, %135, %cst_51 [1] : vector<8x128xf32> to vector<8xf32>
    %137 = vector.shape_cast %136 : vector<8xf32> to vector<8x1xf32>
    %cst_52 = arith.constant 3.125000e-02 : f32
    %138 = vector.broadcast %cst_52 : f32 to vector<8x1xf32>
    %139 = arith.mulf %137, %138 : vector<8x1xf32>
    %c0_53 = arith.constant 0 : index
    %c0_54 = arith.constant 0 : index
    %140 = vector.load %arg13[%c0_53, %c0_54] : memref<8x1xf32, #tpu.memory_space<vmem>>, vector<8x1xf32>
    %c0_55 = arith.constant 0 : index
    %c0_56 = arith.constant 0 : index
    %141 = vector.load %arg14[%c0_55, %c0_56] : memref<8x1xf32, #tpu.memory_space<vmem>>, vector<8x1xf32>
    %cst_57 = arith.constant 9.99999974E-6 : f32
    %142 = vector.broadcast %cst_57 : f32 to vector<8x1xf32>
    %143 = arith.addf %139, %142 : vector<8x1xf32>
    %144 = math.rsqrt %143 : vector<8x1xf32>
    %145 = arith.mulf %140, %144 : vector<8x1xf32>
    %146 = arith.mulf %130, %145 : vector<8x1xf32>
    %147 = arith.subf %141, %146 : vector<8x1xf32>
    %148 = vector.broadcast %145 : vector<8x1xf32> to vector<8x128xf32>
    %149 = arith.mulf %109, %148 : vector<8x128xf32>
    %150 = vector.broadcast %147 : vector<8x1xf32> to vector<8x128xf32>
    %151 = arith.addf %149, %150 : vector<8x128xf32>
    %cst_58 = arith.constant 0.000000e+00 : f32
    %152 = vector.broadcast %cst_58 : f32 to vector<8x128xf32>
    %153 = arith.maximumf %151, %152 : vector<8x128xf32>
    %c0_59 = arith.constant 0 : index
    %c0_60 = arith.constant 0 : index
    %154 = vector.load %arg15[%c0_59, %c0_60] : memref<8x4xf32, #tpu.memory_space<vmem>>, vector<8x4xf32>
    %cst_61 = arith.constant dense<0.000000e+00> : vector<8x128xf32>
    %155 = tpu.matmul %154, %124, %cst_61 {dimension_numbers = #tpu.dot_dimension_numbers<[1], [0], [0], [1], [0, 0, 1, 1], [], []>} : vector<8x4xf32>, vector<4x128xf32>, vector<8x128xf32> -> vector<8x128xf32>
    %c0_62 = arith.constant 0 : index
    %c0_63 = arith.constant 0 : index
    %156 = vector.load %arg16[%c0_62, %c0_63] : memref<8x8xf32, #tpu.memory_space<vmem>>, vector<8x8xf32>
    %cst_64 = arith.constant dense<0.000000e+00> : vector<8x128xf32>
    %157 = tpu.matmul %156, %153, %cst_64 {dimension_numbers = #tpu.dot_dimension_numbers<[1], [0], [0], [1], [0, 0, 1, 1], [], []>} : vector<8x8xf32>, vector<8x128xf32>, vector<8x128xf32> -> vector<8x128xf32>
    %158 = arith.addf %155, %157 : vector<8x128xf32>
    %c0_65 = arith.constant 0 : index
    %c0_66 = arith.constant 0 : index
    %159 = vector.load %arg17[%c0_65, %c0_66] : memref<8x1xf32, #tpu.memory_space<vmem>>, vector<8x1xf32>
    %160 = vector.broadcast %159 : vector<8x1xf32> to vector<8x128xf32>
    %161 = arith.addf %158, %160 : vector<8x128xf32>
    %162 = vector.broadcast %21 : vector<1x128xf32> to vector<8x128xf32>
    %163 = arith.mulf %161, %162 : vector<8x128xf32>
    %cst_67 = arith.constant dense<0.000000e+00> : vector<8xf32>
    %164 = vector.multi_reduction <add>, %163, %cst_67 [1] : vector<8x128xf32> to vector<8xf32>
    %165 = vector.shape_cast %164 : vector<8xf32> to vector<8x1xf32>
    %cst_68 = arith.constant 3.125000e-02 : f32
    %166 = vector.broadcast %cst_68 : f32 to vector<8x1xf32>
    %167 = arith.mulf %165, %166 : vector<8x1xf32>
    %168 = vector.broadcast %167 : vector<8x1xf32> to vector<8x128xf32>
    %169 = arith.subf %161, %168 : vector<8x128xf32>
    %170 = vector.broadcast %21 : vector<1x128xf32> to vector<8x128xf32>
    %171 = arith.mulf %169, %170 : vector<8x128xf32>
    %172 = arith.mulf %171, %171 : vector<8x128xf32>
    %cst_69 = arith.constant dense<0.000000e+00> : vector<8xf32>
    %173 = vector.multi_reduction <add>, %172, %cst_69 [1] : vector<8x128xf32> to vector<8xf32>
    %174 = vector.shape_cast %173 : vector<8xf32> to vector<8x1xf32>
    %cst_70 = arith.constant 3.125000e-02 : f32
    %175 = vector.broadcast %cst_70 : f32 to vector<8x1xf32>
    %176 = arith.mulf %174, %175 : vector<8x1xf32>
    %c0_71 = arith.constant 0 : index
    %c0_72 = arith.constant 0 : index
    %177 = vector.load %arg18[%c0_71, %c0_72] : memref<8x1xf32, #tpu.memory_space<vmem>>, vector<8x1xf32>
    %c0_73 = arith.constant 0 : index
    %c0_74 = arith.constant 0 : index
    %178 = vector.load %arg19[%c0_73, %c0_74] : memref<8x1xf32, #tpu.memory_space<vmem>>, vector<8x1xf32>
    %cst_75 = arith.constant 9.99999974E-6 : f32
    %179 = vector.broadcast %cst_75 : f32 to vector<8x1xf32>
    %180 = arith.addf %176, %179 : vector<8x1xf32>
    %181 = math.rsqrt %180 : vector<8x1xf32>
    %182 = arith.mulf %177, %181 : vector<8x1xf32>
    %183 = arith.mulf %167, %182 : vector<8x1xf32>
    %184 = arith.subf %178, %183 : vector<8x1xf32>
    %185 = vector.broadcast %182 : vector<8x1xf32> to vector<8x128xf32>
    %186 = arith.mulf %161, %185 : vector<8x128xf32>
    %187 = vector.broadcast %184 : vector<8x1xf32> to vector<8x128xf32>
    %188 = arith.addf %186, %187 : vector<8x128xf32>
    %cst_76 = arith.constant 0.000000e+00 : f32
    %189 = vector.broadcast %cst_76 : f32 to vector<8x128xf32>
    %190 = arith.maximumf %188, %189 : vector<8x128xf32>
    %c0_77 = arith.constant 0 : index
    %c0_78 = arith.constant 0 : index
    %191 = vector.load %arg20[%c0_77, %c0_78] : memref<8x8xf32, #tpu.memory_space<vmem>>, vector<8x8xf32>
    %c0_79 = arith.constant 0 : index
    %c0_80 = arith.constant 0 : index
    %192 = vector.load %arg21[%c0_79, %c0_80] : memref<8x8xf32, #tpu.memory_space<vmem>>, vector<8x8xf32>
    %c0_81 = arith.constant 0 : index
    %c0_82 = arith.constant 0 : index
    %193 = vector.load %arg22[%c0_81, %c0_82] : memref<8x8xf32, #tpu.memory_space<vmem>>, vector<8x8xf32>
    %c0_83 = arith.constant 0 : index
    %c0_84 = arith.constant 0 : index
    %194 = vector.load %arg23[%c0_83, %c0_84] : memref<8x1xf32, #tpu.memory_space<vmem>>, vector<8x1xf32>
    %c1_i32_85 = arith.constant 1 : i32
    %195 = tpu.dynamic_rotate %190 by %c1_i32_85 dim 1 : vector<8x128xf32>, i32 -> vector<8x128xf32>
    %196 = vector.broadcast %25 : vector<1x128xf32> to vector<8x128xf32>
    %197 = arith.mulf %195, %196 : vector<8x128xf32>
    %c127_i32_86 = arith.constant 127 : i32
    %198 = tpu.dynamic_rotate %190 by %c127_i32_86 dim 1 : vector<8x128xf32>, i32 -> vector<8x128xf32>
    %199 = vector.broadcast %29 : vector<1x128xf32> to vector<8x128xf32>
    %200 = arith.mulf %198, %199 : vector<8x128xf32>
    %cst_87 = arith.constant dense<0.000000e+00> : vector<8x128xf32>
    %201 = tpu.matmul %192, %190, %cst_87 {dimension_numbers = #tpu.dot_dimension_numbers<[1], [0], [0], [1], [0, 0, 1, 1], [], []>} : vector<8x8xf32>, vector<8x128xf32>, vector<8x128xf32> -> vector<8x128xf32>
    %cst_88 = arith.constant dense<0.000000e+00> : vector<8x128xf32>
    %202 = tpu.matmul %191, %197, %cst_88 {dimension_numbers = #tpu.dot_dimension_numbers<[1], [0], [0], [1], [0, 0, 1, 1], [], []>} : vector<8x8xf32>, vector<8x128xf32>, vector<8x128xf32> -> vector<8x128xf32>
    %203 = arith.addf %201, %202 : vector<8x128xf32>
    %cst_89 = arith.constant dense<0.000000e+00> : vector<8x128xf32>
    %204 = tpu.matmul %193, %200, %cst_89 {dimension_numbers = #tpu.dot_dimension_numbers<[1], [0], [0], [1], [0, 0, 1, 1], [], []>} : vector<8x8xf32>, vector<8x128xf32>, vector<8x128xf32> -> vector<8x128xf32>
    %205 = arith.addf %203, %204 : vector<8x128xf32>
    %206 = vector.broadcast %194 : vector<8x1xf32> to vector<8x128xf32>
    %207 = arith.addf %205, %206 : vector<8x128xf32>
    %c0_90 = arith.constant 0 : index
    %c0_91 = arith.constant 0 : index
    %208 = vector.load %arg25[%c0_90, %c0_91] : memref<8x128xf32, #tpu.memory_space<vmem>>, vector<8x128xf32>
    tpu.vector_store %arg25[%c0_90, %c0_91], %207 {strides = array<i32>} : memref<8x128xf32, #tpu.memory_space<vmem>>, vector<8x128xf32>,
    return
  }
}

</mosaic_0001>

<llo_original>
// kernel: tpu_custom_call.1
$region0: #{tpu_custom_call.1}
  #allocation0 [shape = 'u32[]', space=smem, size = 0x4, offset = 0x4, fixed_abs, tag = 'smem constant byte address 0x4 - core index']
  #allocation1 [shape = 'u32[144,128]{1,0:T(1,128)}', space=vmem, size = 0x12000, scoped, tag = 'internal scratch']
  %s0 = inlined_call_operand.vmem [shape: f32[4,128], index: 0, kind: input, shape index: {}]
  %s1 = inlined_call_operand.vmem [shape: f32[4,1], index: 1, kind: input, shape index: {}]
  %s2 = inlined_call_operand.vmem [shape: f32[4,1], index: 2, kind: input, shape index: {}]
  %s3 = inlined_call_operand.vmem [shape: f32[8,4], index: 3, kind: input, shape index: {}]
  %s4 = inlined_call_operand.vmem [shape: f32[8,1], index: 4, kind: input, shape index: {}]
  %s5 = inlined_call_operand.vmem [shape: f32[8,1], index: 5, kind: input, shape index: {}]
  %s6 = inlined_call_operand.vmem [shape: f32[8,1], index: 6, kind: input, shape index: {}]
  %s7 = inlined_call_operand.vmem [shape: f32[8,8], index: 7, kind: input, shape index: {}]
  %s8 = inlined_call_operand.vmem [shape: f32[8,8], index: 8, kind: input, shape index: {}]
  %s9 = inlined_call_operand.vmem [shape: f32[8,8], index: 9, kind: input, shape index: {}]
  %s10 = inlined_call_operand.vmem [shape: f32[8,1], index: 10, kind: input, shape index: {}]
  %s11 = inlined_call_operand.vmem [shape: f32[4,1], index: 11, kind: input, shape index: {}]
  %s12 = inlined_call_operand.vmem [shape: f32[4,1], index: 12, kind: input, shape index: {}]
  %s13 = inlined_call_operand.vmem [shape: f32[8,1], index: 13, kind: input, shape index: {}]
  %s14 = inlined_call_operand.vmem [shape: f32[8,1], index: 14, kind: input, shape index: {}]
  %s15 = inlined_call_operand.vmem [shape: f32[8,4], index: 15, kind: input, shape index: {}]
  %s16 = inlined_call_operand.vmem [shape: f32[8,8], index: 16, kind: input, shape index: {}]
  %s17 = inlined_call_operand.vmem [shape: f32[8,1], index: 17, kind: input, shape index: {}]
  %s18 = inlined_call_operand.vmem [shape: f32[8,1], index: 18, kind: input, shape index: {}]
  %s19 = inlined_call_operand.vmem [shape: f32[8,1], index: 19, kind: input, shape index: {}]
  %s20 = inlined_call_operand.vmem [shape: f32[8,8], index: 20, kind: input, shape index: {}]
  %s21 = inlined_call_operand.vmem [shape: f32[8,8], index: 21, kind: input, shape index: {}]
  %s22 = inlined_call_operand.vmem [shape: f32[8,8], index: 22, kind: input, shape index: {}]
  %s23 = inlined_call_operand.vmem [shape: f32[8,1], index: 23, kind: input, shape index: {}]
  %s24 = inlined_call_operand.hbm [shape: f32[8,128], index: 24, kind: output, shape index: {0}]
  %s25 = inlined_call_operand.hbm [shape: f32[8,128], index: 25, kind: output, shape index: {1}]
  %26 = xla_tuple %s24, %s25
  %s27 = sld [smem:[#allocation0]]
  $region114: #{tpu_custom_call.1} parent=0
    _
  %s29 = ssub.s32 1, %s27
  %s30 = scalar_select 0, %s29, %s27
  $region1: #{tpu_custom_call.1} parent=0
    #allocation2 [shape = 'u8[4096]{0}', space=vmem, size = 0x1000, scoped, tag = 'output window, operand 0, single buffered']
    #allocation3 [shape = 's32[1]{0}', space=sflag, size = 0x4, scoped, tag = 'scoped memory for tpu_custom_call.1']
    #allocation4 [shape = 'u8[4096]{0}', space=vmem, size = 0x1000, scoped, tag = 'output window, operand 1, single buffered']
    #allocation5 [shape = 's32[1]{0}', space=sflag, size = 0x4, scoped, tag = 'scoped memory for tpu_custom_call.1']
    %31 = vsyncpa [#allocation3], 0
    %32 = vsyncpa [#allocation5], 0
    // Predicated region
    $region2: #{tpu_custom_call.1} parent=1 // pred_check
      _
    $region3: #{tpu_custom_call.1} parent=1 // pred_check_branch
      %34 = sbr.rel (0) target = $region5
    $region4: #{tpu_custom_call.1} parent=1 // pred_region
      _
    $region5: #{tpu_custom_call.1} parent=1 // pred_fallthru
      _
    // Predicated region
    $region6: #{tpu_custom_call.1} parent=1 // pred_check
      _
    $region7: #{tpu_custom_call.1} parent=1 // pred_check_branch
      %36 = sbr.rel (0) target = $region9
    $region8: #{tpu_custom_call.1} parent=1 // pred_region
      _
    $region9: #{tpu_custom_call.1} parent=1 // pred_fallthru
      _
    // Predicated region
    $region10: #{tpu_custom_call.1} parent=1 // pred_check
      _
    $region11: #{tpu_custom_call.1} parent=1 // pred_check_branch
      %38 = sbr.rel (0) target = $region13
    $region12: #{tpu_custom_call.1} parent=1 // pred_region
      _
    $region13: #{tpu_custom_call.1} parent=1 // pred_fallthru
      _
    // Predicated region
    $region14: #{tpu_custom_call.1} parent=1 // pred_check
      _
    $region15: #{tpu_custom_call.1} parent=1 // pred_check_branch
      %40 = sbr.rel (0) target = $region17
    $region16: #{tpu_custom_call.1} parent=1 // pred_region
      _
    $region17: #{tpu_custom_call.1} parent=1 // pred_fallthru
      _
    // Predicated region
    $region18: #{tpu_custom_call.1} parent=1 // pred_check
      _
    $region19: #{tpu_custom_call.1} parent=1 // pred_check_branch
      %42 = sbr.rel (0) target = $region21
    $region20: #{tpu_custom_call.1} parent=1 // pred_region
      _
    $region21: #{tpu_custom_call.1} parent=1 // pred_fallthru
      _
    // Predicated region
    $region22: #{tpu_custom_call.1} parent=1 // pred_check
      _
    $region23: #{tpu_custom_call.1} parent=1 // pred_check_branch
      %44 = sbr.rel (0) target = $region25
    $region24: #{tpu_custom_call.1} parent=1 // pred_region
      _
    $region25: #{tpu_custom_call.1} parent=1 // pred_fallthru
      _
    // Predicated region
    $region26: #{tpu_custom_call.1} parent=1 // pred_check
      _
    $region27: #{tpu_custom_call.1} parent=1 // pred_check_branch
      %46 = sbr.rel (0) target = $region29
    $region28: #{tpu_custom_call.1} parent=1 // pred_region
      _
    $region29: #{tpu_custom_call.1} parent=1 // pred_fallthru
      _
    // Predicated region
    $region30: #{tpu_custom_call.1} parent=1 // pred_check
      _
    $region31: #{tpu_custom_call.1} parent=1 // pred_check_branch
      %48 = sbr.rel (0) target = $region33
    $region32: #{tpu_custom_call.1} parent=1 // pred_region
      _
    $region33: #{tpu_custom_call.1} parent=1 // pred_fallthru
      _
    // Predicated region
    $region34: #{tpu_custom_call.1} parent=1 // pred_check
      _
    $region35: #{tpu_custom_call.1} parent=1 // pred_check_branch
      %50 = sbr.rel (0) target = $region37
    $region36: #{tpu_custom_call.1} parent=1 // pred_region
      _
    $region37: #{tpu_custom_call.1} parent=1 // pred_fallthru
      _
    // Predicated region
    $region38: #{tpu_custom_call.1} parent=1 // pred_check
      _
    $region39: #{tpu_custom_call.1} parent=1 // pred_check_branch
      %52 = sbr.rel (0) target = $region41
    $region40: #{tpu_custom_call.1} parent=1 // pred_region
      _
    $region41: #{tpu_custom_call.1} parent=1 // pred_fallthru
      _
    // Predicated region
    $region42: #{tpu_custom_call.1} parent=1 // pred_check
      _
    $region43: #{tpu_custom_call.1} parent=1 // pred_check_branch
      %54 = sbr.rel (0) target = $region45
    $region44: #{tpu_custom_call.1} parent=1 // pred_region
      _
    $region45: #{tpu_custom_call.1} parent=1 // pred_fallthru
      _
    // Predicated region
    $region46: #{tpu_custom_call.1} parent=1 // pred_check
      _
    $region47: #{tpu_custom_call.1} parent=1 // pred_check_branch
      %56 = sbr.rel (0) target = $region49
    $region48: #{tpu_custom_call.1} parent=1 // pred_region
      _
    $region49: #{tpu_custom_call.1} parent=1 // pred_fallthru
      _
    // Predicated region
    $region50: #{tpu_custom_call.1} parent=1 // pred_check
      _
    $region51: #{tpu_custom_call.1} parent=1 // pred_check_branch
      %58 = sbr.rel (0) target = $region53
    $region52: #{tpu_custom_call.1} parent=1 // pred_region
      _
    $region53: #{tpu_custom_call.1} parent=1 // pred_fallthru
      _
    // Predicated region
    $region54: #{tpu_custom_call.1} parent=1 // pred_check
      _
    $region55: #{tpu_custom_call.1} parent=1 // pred_check_branch
      %60 = sbr.rel (0) target = $region57
    $region56: #{tpu_custom_call.1} parent=1 // pred_region
      _
    $region57: #{tpu_custom_call.1} parent=1 // pred_fallthru
      _
    // Predicated region
    $region58: #{tpu_custom_call.1} parent=1 // pred_check
      _
    $region59: #{tpu_custom_call.1} parent=1 // pred_check_branch
      %62 = sbr.rel (0) target = $region61
    $region60: #{tpu_custom_call.1} parent=1 // pred_region
      _
    $region61: #{tpu_custom_call.1} parent=1 // pred_fallthru
      _
    // Predicated region
    $region62: #{tpu_custom_call.1} parent=1 // pred_check
      _
    $region63: #{tpu_custom_call.1} parent=1 // pred_check_branch
      %64 = sbr.rel (0) target = $region65
    $region64: #{tpu_custom_call.1} parent=1 // pred_region
      _
    $region65: #{tpu_custom_call.1} parent=1 // pred_fallthru
      _
    // Predicated region
    $region66: #{tpu_custom_call.1} parent=1 // pred_check
      _
    $region67: #{tpu_custom_call.1} parent=1 // pred_check_branch
      %66 = sbr.rel (0) target = $region69
    $region68: #{tpu_custom_call.1} parent=1 // pred_region
      _
    $region69: #{tpu_custom_call.1} parent=1 // pred_fallthru
      _
    // Predicated region
    $region70: #{tpu_custom_call.1} parent=1 // pred_check
      _
    $region71: #{tpu_custom_call.1} parent=1 // pred_check_branch
      %68 = sbr.rel (0) target = $region73
    $region72: #{tpu_custom_call.1} parent=1 // pred_region
      _
    $region73: #{tpu_custom_call.1} parent=1 // pred_fallthru
      _
    // Predicated region
    $region74: #{tpu_custom_call.1} parent=1 // pred_check
      _
    $region75: #{tpu_custom_call.1} parent=1 // pred_check_branch
      %70 = sbr.rel (0) target = $region77
    $region76: #{tpu_custom_call.1} parent=1 // pred_region
      _
    $region77: #{tpu_custom_call.1} parent=1 // pred_fallthru
      _
    // Predicated region
    $region78: #{tpu_custom_call.1} parent=1 // pred_check
      _
    $region79: #{tpu_custom_call.1} parent=1 // pred_check_branch
      %72 = sbr.rel (0) target = $region81
    $region80: #{tpu_custom_call.1} parent=1 // pred_region
      _
    $region81: #{tpu_custom_call.1} parent=1 // pred_fallthru
      _
    // Predicated region
    $region82: #{tpu_custom_call.1} parent=1 // pred_check
      _
    $region83: #{tpu_custom_call.1} parent=1 // pred_check_branch
      %74 = sbr.rel (0) target = $region85
    $region84: #{tpu_custom_call.1} parent=1 // pred_region
      _
    $region85: #{tpu_custom_call.1} parent=1 // pred_fallthru
      _
    // Predicated region
    $region86: #{tpu_custom_call.1} parent=1 // pred_check
      _
    $region87: #{tpu_custom_call.1} parent=1 // pred_check_branch
      %76 = sbr.rel (0) target = $region89
    $region88: #{tpu_custom_call.1} parent=1 // pred_region
      _
    $region89: #{tpu_custom_call.1} parent=1 // pred_fallthru
      _
    // Predicated region
    $region90: #{tpu_custom_call.1} parent=1 // pred_check
      _
    $region91: #{tpu_custom_call.1} parent=1 // pred_check_branch
      %78 = sbr.rel (0) target = $region93
    $region92: #{tpu_custom_call.1} parent=1 // pred_region
      _
    $region93: #{tpu_custom_call.1} parent=1 // pred_fallthru
      _
    // Predicated region
    $region94: #{tpu_custom_call.1} parent=1 // pred_check
      _
    $region95: #{tpu_custom_call.1} parent=1 // pred_check_branch
      %80 = sbr.rel (0) target = $region97
    $region96: #{tpu_custom_call.1} parent=1 // pred_region
      _
    $region97: #{tpu_custom_call.1} parent=1 // pred_fallthru
      _
    %v81 = vld [vmem:[%s0] sm:$0xf]
    %v82 = vlaneseq
    %v83 = vand.u32 %v82, 127
    %vm84 = vcmp.lt.s32.totalorder %v83, 0
    %v85 = vsub.s32 0, %v83
    %v86 = vsel %vm84, %v85, %v83
    %v87 = vshrl.u32 %v86, 4
    %v88 = vand.u32 %v86, 15
    %v89 = vsub.s32 0, %v88
    %v90 = vsel %vm84, %v89, %v88
    %vm91 = vcmp.ne.s32.totalorder %v90, 0
    %vm92 = vcmp.lt.s32.totalorder %v90, 0
    %vm93 = vmand %vm92, %vm91
    %v94 = vadd.s32 %v90, 16
    %v95 = vsel %vm93, %v94, %v90
    %vm96 = vcmp.lt.s32.totalorder %v83, 32
    %v97 = vsel %vm96, 1, 0
    %v98 = vcvt.s32.f32 %v97
    %vm99 = vcmp.ne.s32.totalorder %v95, 0
    %v100 = vsel %vm99, 1, 0
    %v101 = vcvt.s32.f32 %v100
    %vm102 = vcmp.ne.s32.totalorder %v95, 15
    %v103 = vsel %vm102, 1, 0
    %v104 = vcvt.s32.f32 %v103
    %v105 = vmul.f32 %v81, %v98
    %vm106 = vcmask 1043456
    %v107 = vsel %vm106, %v105, 0.0
    %108 = vadd.xlane.f32.xlu0 %v107
    %v109 = vpop.xlane.xlu0 %108
    %v110 = vmul.f32 %v109, 0.03125
    %v111 = vsub.f32 %v81, %v110
    %v112 = vmul.f32 %v111, %v98
    %v113 = vmul.f32 %v112, %v112
    %v114 = vsel %vm106, %v113, 0.0
    %115 = vadd.xlane.f32.xlu0 %v114
    %v116 = vpop.xlane.xlu0 %115
    %v117 = vmul.f32 %v116, 0.03125
    %v118 = vld [vmem:[%s1] sm:$0xf]
    %v119 = vld [vmem:[%s2] sm:$0xf]
    %v120 = vadd.f32 %v117, 1e-05
    %v121 = vrsqrt.pop %v120
    %v122 = vmul.f32 %v118, %v121
    %v123 = vmul.f32 %v110, %v122
    %v124 = vsub.f32 %v119, %v123
    %126 = vset.pattern.permute.xlu0 0
    %127 = vperm.xlu0 %126, %v122
    %v128 = vpop.permute.xlu0 %127
    %v130 = vmul.f32 %v81, %v128
    %132 = vset.pattern.permute.xlu0 0
    %133 = vperm.xlu0 %132, %v124
    %v134 = vpop.permute.xlu0 %133
    %v136 = vadd.f32 %v130, %v134
    %v137 = vmax.f32 %v136, 0.0
    %v138 = vld [vmem:[%s3] sm:$0xff]
    %v139 = vld [vmem:[%s4] sm:$0xff]
    %141 = vset.pattern.permute.xlu0 0
    %142 = vperm.xlu0 %141, %v139
    %v143 = vpop.permute.xlu0 %142
    %vm145 = vcmask 31744
    %v147 = vsel %vm145, %v138, 0
    %v150 = vsel %vm106, %v137, 0
    %152 = vmatprep.subr.mxu0 0.0
    %153 = vmatpush1.msra.mxu0 0.0
    %154 = vmatprep.subr.mxu0 0.0
    %155 = vmatpush1.msra.mxu0 0.0
    %156 = vmatprep.subr.mxu0 0.0
    %157 = vmatpush1.msra.mxu0 0.0
    %158 = vmatprep.subr.mxu0 0.0
    %159 = vmatpush1.msra.mxu0 0.0
    %160 = vmatprep.subr.mxu0 0.0
    %161 = vmatpush1.msra.mxu0 0.0
    %162 = vmatprep.subr.mxu0 0.0
    %163 = vmatpush1.msra.mxu0 0.0
    %164 = vmatprep.subr.mxu0 0.0
    %165 = vmatpush1.msra.mxu0 0.0
    %166 = vmatprep.subr.mxu0 0.0
    %167 = vmatpush1.msra.mxu0 0.0
    %168 = vmatprep.subr.mxu0 0.0
    %169 = vmatpush1.msra.mxu0 0.0
    %170 = vmatprep.subr.mxu0 0.0
    %171 = vmatpush1.msra.mxu0 0.0
    %172 = vmatprep.subr.mxu0 0.0
    %173 = vmatpush1.msra.mxu0 0.0
    %174 = vmatprep.subr.mxu0 0.0
    %175 = vmatpush1.msra.mxu0 0.0
    %176 = vmatprep.subr.mxu0 0.0
    %177 = vmatpush1.msra.mxu0 0.0
    %178 = vmatprep.subr.mxu0 0.0
    %179 = vmatpush1.msra.mxu0 0.0
    %180 = vmatprep.subr.mxu0 0.0
    %181 = vmatpush1.msra.mxu0 0.0
    %182 = vmatprep.subr.mxu0 0.0
    %183 = vmatpush1.msra.mxu0 %v150
    %184 = vmatprep.subr.mxu0 0.0
    %185 = vmatpush2.msra.mxu0 0.0
    %186 = vmatprep.subr.mxu0 0.0
    %187 = vmatpush2.msra.mxu0 0.0
    %188 = vmatprep.subr.mxu0 0.0
    %189 = vmatpush2.msra.mxu0 0.0
    %190 = vmatprep.subr.mxu0 0.0
    %191 = vmatpush2.msra.mxu0 0.0
    %192 = vmatprep.subr.mxu0 0.0
    %193 = vmatpush2.msra.mxu0 0.0
    %194 = vmatprep.subr.mxu0 0.0
    %195 = vmatpush2.msra.mxu0 0.0
    %196 = vmatprep.subr.mxu0 0.0
    %197 = vmatpush2.msra.mxu0 0.0
    %198 = vmatprep.subr.mxu0 0.0
    %199 = vmatpush2.msra.mxu0 0.0
    %200 = vmatprep.subr.mxu0 0.0
    %201 = vmatpush2.msra.mxu0 0.0
    %202 = vmatprep.subr.mxu0 0.0
    %203 = vmatpush2.msra.mxu0 0.0
    %204 = vmatprep.subr.mxu0 0.0
    %205 = vmatpush2.msra.mxu0 0.0
    %206 = vmatprep.subr.mxu0 0.0
    %207 = vmatpush2.msra.mxu0 0.0
    %208 = vmatprep.subr.mxu0 0.0
    %209 = vmatpush2.msra.mxu0 0.0
    %210 = vmatprep.subr.mxu0 0.0
    %211 = vmatpush2.msra.mxu0 0.0
    %212 = vmatprep.subr.mxu0 0.0
    %213 = vmatpush2.msra.mxu0 0.0
    %214 = vmatprep.subr.mxu0 0.0
    %215 = vmatpush2.msra.mxu0 0.0
    %216 = vmatprep.mubr.f32.mxu0 0.0
    %217 = vmatmul.mubr.f32.gmra.mxu0 %v147
    %v218 = vpop.f32.mrf.mxu0
    %v219 = vadd.f32 %v143, %v218
    %v220 = vpop.f32.mrf.mxu0
    %221 = vdwg.mxu0
    %v222 = vmul.f32 %v219, %v98
    %223 = vadd.xlane.f32.xlu0 %v222
    %v224 = vpop.xlane.xlu0 %223
    %v225 = vmul.f32 %v224, 0.03125
    %v226 = vsub.f32 %v219, %v225
    %v227 = vmul.f32 %v226, %v98
    %v228 = vmul.f32 %v227, %v227
    %229 = vadd.xlane.f32.xlu0 %v228
    %v230 = vpop.xlane.xlu0 %229
    %v231 = vmul.f32 %v230, 0.03125
    %v232 = vld [vmem:[%s5] sm:$0xff]
    %v233 = vld [vmem:[%s6] sm:$0xff]
    %v234 = vadd.f32 %v231, 1e-05
    %v235 = vrsqrt.pop %v234
    %v236 = vmul.f32 %v232, %v235
    %v237 = vmul.f32 %v225, %v236
    %v238 = vsub.f32 %v233, %v237
    %240 = vset.pattern.permute.xlu0 0
    %241 = vperm.xlu0 %240, %v236
    %v242 = vpop.permute.xlu0 %241
    %v244 = vmul.f32 %v219, %v242
    %246 = vset.pattern.permute.xlu0 0
    %247 = vperm.xlu0 %246, %v238
    %v248 = vpop.permute.xlu0 %247
    %v250 = vadd.f32 %v244, %v248
    %v251 = vmax.f32 %v250, 0.0
    %v252 = vld [vmem:[%s7] sm:$0xff]
    %v253 = vld [vmem:[%s8] sm:$0xff]
    %v254 = vld [vmem:[%s9] sm:$0xff]
    %v255 = vld [vmem:[%s10] sm:$0xff]
    %256 = vrot.lane.b32.xlu0 %v251, 1
    %v257 = vpop.permute.xlu0 %256
    %v258 = vmul.f32 %v257, %v101
    %259 = vrot.lane.b32.xlu0 %v251, 127
    %v260 = vpop.permute.xlu0 %259
    %v261 = vmul.f32 %v260, %v104
    %vm262 = vcmask 64512
    %v264 = vsel %vm262, %v252, 0
    %266 = vmatprep.subr.mxu0 0.0
    %267 = vmatpush1.msra.mxu0 0.0
    %268 = vmatprep.subr.mxu0 0.0
    %269 = vmatpush1.msra.mxu0 0.0
    %270 = vmatprep.subr.mxu0 0.0
    %271 = vmatpush1.msra.mxu0 0.0
    %272 = vmatprep.subr.mxu0 0.0
    %273 = vmatpush1.msra.mxu0 0.0
    %274 = vmatprep.subr.mxu0 0.0
    %275 = vmatpush1.msra.mxu0 0.0
    %276 = vmatprep.subr.mxu0 0.0
    %277 = vmatpush1.msra.mxu0 0.0
    %278 = vmatprep.subr.mxu0 0.0
    %279 = vmatpush1.msra.mxu0 0.0
    %280 = vmatprep.subr.mxu0 0.0
    %281 = vmatpush1.msra.mxu0 0.0
    %282 = vmatprep.subr.mxu0 0.0
    %283 = vmatpush1.msra.mxu0 0.0
    %284 = vmatprep.subr.mxu0 0.0
    %285 = vmatpush1.msra.mxu0 0.0
    %286 = vmatprep.subr.mxu0 0.0
    %287 = vmatpush1.msra.mxu0 0.0
    %288 = vmatprep.subr.mxu0 0.0
    %289 = vmatpush1.msra.mxu0 0.0
    %290 = vmatprep.subr.mxu0 0.0
    %291 = vmatpush1.msra.mxu0 0.0
    %292 = vmatprep.subr.mxu0 0.0
    %293 = vmatpush1.msra.mxu0 0.0
    %294 = vmatprep.subr.mxu0 0.0
    %295 = vmatpush1.msra.mxu0 0.0
    %296 = vmatprep.subr.mxu0 0.0
    %297 = vmatpush1.msra.mxu0 %v258
    %298 = vmatprep.subr.mxu0 0.0
    %299 = vmatpush2.msra.mxu0 0.0
    %300 = vmatprep.subr.mxu0 0.0
    %301 = vmatpush2.msra.mxu0 0.0
    %302 = vmatprep.subr.mxu0 0.0
    %303 = vmatpush2.msra.mxu0 0.0
    %304 = vmatprep.subr.mxu0 0.0
    %305 = vmatpush2.msra.mxu0 0.0
    %306 = vmatprep.subr.mxu0 0.0
    %307 = vmatpush2.msra.mxu0 0.0
    %308 = vmatprep.subr.mxu0 0.0
    %309 = vmatpush2.msra.mxu0 0.0
    %310 = vmatprep.subr.mxu0 0.0
    %311 = vmatpush2.msra.mxu0 0.0
    %312 = vmatprep.subr.mxu0 0.0
    %313 = vmatpush2.msra.mxu0 0.0
    %314 = vmatprep.subr.mxu0 0.0
    %315 = vmatpush2.msra.mxu0 0.0
    %316 = vmatprep.subr.mxu0 0.0
    %317 = vmatpush2.msra.mxu0 0.0
    %318 = vmatprep.subr.mxu0 0.0
    %319 = vmatpush2.msra.mxu0 0.0
    %320 = vmatprep.subr.mxu0 0.0
    %321 = vmatpush2.msra.mxu0 0.0
    %322 = vmatprep.subr.mxu0 0.0
    %323 = vmatpush2.msra.mxu0 0.0
    %324 = vmatprep.subr.mxu0 0.0
    %325 = vmatpush2.msra.mxu0 0.0
    %326 = vmatprep.subr.mxu0 0.0
    %327 = vmatpush2.msra.mxu0 0.0
    %328 = vmatprep.subr.mxu0 0.0
    %329 = vmatpush2.msra.mxu0 0.0
    %330 = vmatprep.mubr.f32.mxu0 0.0
    %331 = vmatmul.mubr.f32.gmra.mxu0 %v264
    %v332 = vpop.f32.mrf.mxu0
    %v333 = vadd.f32 0.0, %v332
    %v334 = vpop.f32.mrf.mxu0
    %335 = vdwg.mxu0
    %v337 = vsel %vm262, %v253, 0
    %339 = vmatprep.subr.mxu0 0.0
    %340 = vmatpush1.msra.mxu0 0.0
    %341 = vmatprep.subr.mxu0 0.0
    %342 = vmatpush1.msra.mxu0 0.0
    %343 = vmatprep.subr.mxu0 0.0
    %344 = vmatpush1.msra.mxu0 0.0
    %345 = vmatprep.subr.mxu0 0.0
    %346 = vmatpush1.msra.mxu0 0.0
    %347 = vmatprep.subr.mxu0 0.0
    %348 = vmatpush1.msra.mxu0 0.0
    %349 = vmatprep.subr.mxu0 0.0
    %350 = vmatpush1.msra.mxu0 0.0
    %351 = vmatprep.subr.mxu0 0.0
    %352 = vmatpush1.msra.mxu0 0.0
    %353 = vmatprep.subr.mxu0 0.0
    %354 = vmatpush1.msra.mxu0 0.0
    %355 = vmatprep.subr.mxu0 0.0
    %356 = vmatpush1.msra.mxu0 0.0
    %357 = vmatprep.subr.mxu0 0.0
    %358 = vmatpush1.msra.mxu0 0.0
    %359 = vmatprep.subr.mxu0 0.0
    %360 = vmatpush1.msra.mxu0 0.0
    %361 = vmatprep.subr.mxu0 0.0
    %362 = vmatpush1.msra.mxu0 0.0
    %363 = vmatprep.subr.mxu0 0.0
    %364 = vmatpush1.msra.mxu0 0.0
    %365 = vmatprep.subr.mxu0 0.0
    %366 = vmatpush1.msra.mxu0 0.0
    %367 = vmatprep.subr.mxu0 0.0
    %368 = vmatpush1.msra.mxu0 0.0
    %369 = vmatprep.subr.mxu0 0.0
    %370 = vmatpush1.msra.mxu0 %v251
    %371 = vmatprep.subr.mxu0 0.0
    %372 = vmatpush2.msra.mxu0 0.0
    %373 = vmatprep.subr.mxu0 0.0
    %374 = vmatpush2.msra.mxu0 0.0
    %375 = vmatprep.subr.mxu0 0.0
    %376 = vmatpush2.msra.mxu0 0.0
    %377 = vmatprep.subr.mxu0 0.0
    %378 = vmatpush2.msra.mxu0 0.0
    %379 = vmatprep.subr.mxu0 0.0
    %380 = vmatpush2.msra.mxu0 0.0
    %381 = vmatprep.subr.mxu0 0.0
    %382 = vmatpush2.msra.mxu0 0.0
    %383 = vmatprep.subr.mxu0 0.0
    %384 = vmatpush2.msra.mxu0 0.0
    %385 = vmatprep.subr.mxu0 0.0
    %386 = vmatpush2.msra.mxu0 0.0
    %387 = vmatprep.subr.mxu0 0.0
    %388 = vmatpush2.msra.mxu0 0.0
    %389 = vmatprep.subr.mxu0 0.0
    %390 = vmatpush2.msra.mxu0 0.0
    %391 = vmatprep.subr.mxu0 0.0
    %392 = vmatpush2.msra.mxu0 0.0
    %393 = vmatprep.subr.mxu0 0.0
    %394 = vmatpush2.msra.mxu0 0.0
    %395 = vmatprep.subr.mxu0 0.0
    %396 = vmatpush2.msra.mxu0 0.0
    %397 = vmatprep.subr.mxu0 0.0
    %398 = vmatpush2.msra.mxu0 0.0
    %399 = vmatprep.subr.mxu0 0.0
    %400 = vmatpush2.msra.mxu0 0.0
    %401 = vmatprep.subr.mxu0 0.0
    %402 = vmatpush2.msra.mxu0 0.0
    %403 = vmatprep.mubr.f32.mxu0 0.0
    %404 = vmatmul.mubr.f32.gmra.mxu0 %v337
    %v405 = vpop.f32.mrf.mxu0
    %v406 = vadd.f32 %v333, %v405
    %v407 = vpop.f32.mrf.mxu0
    %408 = vdwg.mxu0
    %v410 = vsel %vm262, %v254, 0
    %412 = vmatprep.subr.mxu0 0.0
    %413 = vmatpush1.msra.mxu0 0.0
    %414 = vmatprep.subr.mxu0 0.0
    %415 = vmatpush1.msra.mxu0 0.0
    %416 = vmatprep.subr.mxu0 0.0
    %417 = vmatpush1.msra.mxu0 0.0
    %418 = vmatprep.subr.mxu0 0.0
    %419 = vmatpush1.msra.mxu0 0.0
    %420 = vmatprep.subr.mxu0 0.0
    %421 = vmatpush1.msra.mxu0 0.0
    %422 = vmatprep.subr.mxu0 0.0
    %423 = vmatpush1.msra.mxu0 0.0
    %424 = vmatprep.subr.mxu0 0.0
    %425 = vmatpush1.msra.mxu0 0.0
    %426 = vmatprep.subr.mxu0 0.0
    %427 = vmatpush1.msra.mxu0 0.0
    %428 = vmatprep.subr.mxu0 0.0
    %429 = vmatpush1.msra.mxu0 0.0
    %430 = vmatprep.subr.mxu0 0.0
    %431 = vmatpush1.msra.mxu0 0.0
    %432 = vmatprep.subr.mxu0 0.0
    %433 = vmatpush1.msra.mxu0 0.0
    %434 = vmatprep.subr.mxu0 0.0
    %435 = vmatpush1.msra.mxu0 0.0
    %436 = vmatprep.subr.mxu0 0.0
    %437 = vmatpush1.msra.mxu0 0.0
    %438 = vmatprep.subr.mxu0 0.0
    %439 = vmatpush1.msra.mxu0 0.0
    %440 = vmatprep.subr.mxu0 0.0
    %441 = vmatpush1.msra.mxu0 0.0
    %442 = vmatprep.subr.mxu0 0.0
    %443 = vmatpush1.msra.mxu0 %v261
    %444 = vmatprep.subr.mxu0 0.0
    %445 = vmatpush2.msra.mxu0 0.0
    %446 = vmatprep.subr.mxu0 0.0
    %447 = vmatpush2.msra.mxu0 0.0
    %448 = vmatprep.subr.mxu0 0.0
    %449 = vmatpush2.msra.mxu0 0.0
    %450 = vmatprep.subr.mxu0 0.0
    %451 = vmatpush2.msra.mxu0 0.0
    %452 = vmatprep.subr.mxu0 0.0
    %453 = vmatpush2.msra.mxu0 0.0
    %454 = vmatprep.subr.mxu0 0.0
    %455 = vmatpush2.msra.mxu0 0.0
    %456 = vmatprep.subr.mxu0 0.0
    %457 = vmatpush2.msra.mxu0 0.0
    %458 = vmatprep.subr.mxu0 0.0
    %459 = vmatpush2.msra.mxu0 0.0
    %460 = vmatprep.subr.mxu0 0.0
    %461 = vmatpush2.msra.mxu0 0.0
    %462 = vmatprep.subr.mxu0 0.0
    %463 = vmatpush2.msra.mxu0 0.0
    %464 = vmatprep.subr.mxu0 0.0
    %465 = vmatpush2.msra.mxu0 0.0
    %466 = vmatprep.subr.mxu0 0.0
    %467 = vmatpush2.msra.mxu0 0.0
    %468 = vmatprep.subr.mxu0 0.0
    %469 = vmatpush2.msra.mxu0 0.0
    %470 = vmatprep.subr.mxu0 0.0
    %471 = vmatpush2.msra.mxu0 0.0
    %472 = vmatprep.subr.mxu0 0.0
    %473 = vmatpush2.msra.mxu0 0.0
    %474 = vmatprep.subr.mxu0 0.0
    %475 = vmatpush2.msra.mxu0 0.0
    %476 = vmatprep.mubr.f32.mxu0 0.0
    %477 = vmatmul.mubr.f32.gmra.mxu0 %v410
    %v478 = vpop.f32.mrf.mxu0
    %v479 = vadd.f32 0.0, %v478
    %v480 = vpop.f32.mrf.mxu0
    %481 = vdwg.mxu0
    %v482 = vadd.f32 %v406, %v479
    %484 = vset.pattern.permute.xlu0 0
    %485 = vperm.xlu0 %484, %v255
    %v486 = vpop.permute.xlu0 %485
    %v488 = vadd.f32 %v482, %v486
    %489 = vst [vmem:[#allocation2] sm:$0xff] %v488
    %v490 = vld [vmem:[%s11] sm:$0xf]
    %v491 = vld [vmem:[%s12] sm:$0xf]
    %v492 = vmul.f32 %v490, %v121
    %v493 = vmul.f32 %v110, %v492
    %v494 = vsub.f32 %v491, %v493
    %496 = vset.pattern.permute.xlu0 0
    %497 = vperm.xlu0 %496, %v492
    %v498 = vpop.permute.xlu0 %497
    %v500 = vmul.f32 %v81, %v498
    %502 = vset.pattern.permute.xlu0 0
    %503 = vperm.xlu0 %502, %v494
    %v504 = vpop.permute.xlu0 %503
    %v506 = vadd.f32 %v500, %v504
    %v507 = vmax.f32 %v506, 0.0
    %v508 = vmul.f32 %v488, %v98
    %509 = vadd.xlane.f32.xlu0 %v508
    %v510 = vpop.xlane.xlu0 %509
    %v511 = vmul.f32 %v510, 0.03125
    %v512 = vsub.f32 %v488, %v511
    %v513 = vmul.f32 %v512, %v98
    %v514 = vmul.f32 %v513, %v513
    %515 = vadd.xlane.f32.xlu0 %v514
    %v516 = vpop.xlane.xlu0 %515
    %v517 = vmul.f32 %v516, 0.03125
    %v518 = vld [vmem:[%s13] sm:$0xff]
    %v519 = vld [vmem:[%s14] sm:$0xff]
    %v520 = vadd.f32 %v517, 1e-05
    %v521 = vrsqrt.pop %v520
    %v522 = vmul.f32 %v518, %v521
    %v523 = vmul.f32 %v511, %v522
    %v524 = vsub.f32 %v519, %v523
    %526 = vset.pattern.permute.xlu0 0
    %527 = vperm.xlu0 %526, %v522
    %v528 = vpop.permute.xlu0 %527
    %v530 = vmul.f32 %v488, %v528
    %532 = vset.pattern.permute.xlu0 0
    %533 = vperm.xlu0 %532, %v524
    %v534 = vpop.permute.xlu0 %533
    %v536 = vadd.f32 %v530, %v534
    %v537 = vmax.f32 %v536, 0.0
    %v538 = vld [vmem:[%s15] sm:$0xff]
    %v539 = vld [vmem:[%s16] sm:$0xff]
    %v541 = vsel %vm262, %v539, 0
    %543 = vmatprep.subr.mxu0 0.0
    %544 = vmatpush1.msra.mxu0 0.0
    %545 = vmatprep.subr.mxu0 0.0
    %546 = vmatpush1.msra.mxu0 0.0
    %547 = vmatprep.subr.mxu0 0.0
    %548 = vmatpush1.msra.mxu0 0.0
    %549 = vmatprep.subr.mxu0 0.0
    %550 = vmatpush1.msra.mxu0 0.0
    %551 = vmatprep.subr.mxu0 0.0
    %552 = vmatpush1.msra.mxu0 0.0
    %553 = vmatprep.subr.mxu0 0.0
    %554 = vmatpush1.msra.mxu0 0.0
    %555 = vmatprep.subr.mxu0 0.0
    %556 = vmatpush1.msra.mxu0 0.0
    %557 = vmatprep.subr.mxu0 0.0
    %558 = vmatpush1.msra.mxu0 0.0
    %559 = vmatprep.subr.mxu0 0.0
    %560 = vmatpush1.msra.mxu0 0.0
    %561 = vmatprep.subr.mxu0 0.0
    %562 = vmatpush1.msra.mxu0 0.0
    %563 = vmatprep.subr.mxu0 0.0
    %564 = vmatpush1.msra.mxu0 0.0
    %565 = vmatprep.subr.mxu0 0.0
    %566 = vmatpush1.msra.mxu0 0.0
    %567 = vmatprep.subr.mxu0 0.0
    %568 = vmatpush1.msra.mxu0 0.0
    %569 = vmatprep.subr.mxu0 0.0
    %570 = vmatpush1.msra.mxu0 0.0
    %571 = vmatprep.subr.mxu0 0.0
    %572 = vmatpush1.msra.mxu0 0.0
    %573 = vmatprep.subr.mxu0 0.0
    %574 = vmatpush1.msra.mxu0 %v537
    %575 = vmatprep.subr.mxu0 0.0
    %576 = vmatpush2.msra.mxu0 0.0
    %577 = vmatprep.subr.mxu0 0.0
    %578 = vmatpush2.msra.mxu0 0.0
    %579 = vmatprep.subr.mxu0 0.0
    %580 = vmatpush2.msra.mxu0 0.0
    %581 = vmatprep.subr.mxu0 0.0
    %582 = vmatpush2.msra.mxu0 0.0
    %583 = vmatprep.subr.mxu0 0.0
    %584 = vmatpush2.msra.mxu0 0.0
    %585 = vmatprep.subr.mxu0 0.0
    %586 = vmatpush2.msra.mxu0 0.0
    %587 = vmatprep.subr.mxu0 0.0
    %588 = vmatpush2.msra.mxu0 0.0
    %589 = vmatprep.subr.mxu0 0.0
    %590 = vmatpush2.msra.mxu0 0.0
    %591 = vmatprep.subr.mxu0 0.0
    %592 = vmatpush2.msra.mxu0 0.0
    %593 = vmatprep.subr.mxu0 0.0
    %594 = vmatpush2.msra.mxu0 0.0
    %595 = vmatprep.subr.mxu0 0.0
    %596 = vmatpush2.msra.mxu0 0.0
    %597 = vmatprep.subr.mxu0 0.0
    %598 = vmatpush2.msra.mxu0 0.0
    %599 = vmatprep.subr.mxu0 0.0
    %600 = vmatpush2.msra.mxu0 0.0
    %601 = vmatprep.subr.mxu0 0.0
    %602 = vmatpush2.msra.mxu0 0.0
    %603 = vmatprep.subr.mxu0 0.0
    %604 = vmatpush2.msra.mxu0 0.0
    %605 = vmatprep.subr.mxu0 0.0
    %606 = vmatpush2.msra.mxu0 0.0
    %607 = vmatprep.mubr.f32.mxu0 0.0
    %608 = vmatmul.mubr.f32.gmra.mxu0 %v541
    %v609 = vpop.f32.mrf.mxu0
    %v610 = vadd.f32 0.0, %v609
    %v611 = vpop.f32.mrf.mxu0
    %612 = vdwg.mxu0
    %v614 = vsel %vm145, %v538, 0
    %v617 = vsel %vm106, %v507, 0
    %619 = vmatprep.subr.mxu0 0.0
    %620 = vmatpush1.msra.mxu0 0.0
    %621 = vmatprep.subr.mxu0 0.0
    %622 = vmatpush1.msra.mxu0 0.0
    %623 = vmatprep.subr.mxu0 0.0
    %624 = vmatpush1.msra.mxu0 0.0
    %625 = vmatprep.subr.mxu0 0.0
    %626 = vmatpush1.msra.mxu0 0.0
    %627 = vmatprep.subr.mxu0 0.0
    %628 = vmatpush1.msra.mxu0 0.0
    %629 = vmatprep.subr.mxu0 0.0
    %630 = vmatpush1.msra.mxu0 0.0
    %631 = vmatprep.subr.mxu0 0.0
    %632 = vmatpush1.msra.mxu0 0.0
    %633 = vmatprep.subr.mxu0 0.0
    %634 = vmatpush1.msra.mxu0 0.0
    %635 = vmatprep.subr.mxu0 0.0
    %636 = vmatpush1.msra.mxu0 0.0
    %637 = vmatprep.subr.mxu0 0.0
    %638 = vmatpush1.msra.mxu0 0.0
    %639 = vmatprep.subr.mxu0 0.0
    %640 = vmatpush1.msra.mxu0 0.0
    %641 = vmatprep.subr.mxu0 0.0
    %642 = vmatpush1.msra.mxu0 0.0
    %643 = vmatprep.subr.mxu0 0.0
    %644 = vmatpush1.msra.mxu0 0.0
    %645 = vmatprep.subr.mxu0 0.0
    %646 = vmatpush1.msra.mxu0 0.0
    %647 = vmatprep.subr.mxu0 0.0
    %648 = vmatpush1.msra.mxu0 0.0
    %649 = vmatprep.subr.mxu0 0.0
    %650 = vmatpush1.msra.mxu0 %v617
    %651 = vmatprep.subr.mxu0 0.0
    %652 = vmatpush2.msra.mxu0 0.0
    %653 = vmatprep.subr.mxu0 0.0
    %654 = vmatpush2.msra.mxu0 0.0
    %655 = vmatprep.subr.mxu0 0.0
    %656 = vmatpush2.msra.mxu0 0.0
    %657 = vmatprep.subr.mxu0 0.0
    %658 = vmatpush2.msra.mxu0 0.0
    %659 = vmatprep.subr.mxu0 0.0
    %660 = vmatpush2.msra.mxu0 0.0
    %661 = vmatprep.subr.mxu0 0.0
    %662 = vmatpush2.msra.mxu0 0.0
    %663 = vmatprep.subr.mxu0 0.0
    %664 = vmatpush2.msra.mxu0 0.0
    %665 = vmatprep.subr.mxu0 0.0
    %666 = vmatpush2.msra.mxu0 0.0
    %667 = vmatprep.subr.mxu0 0.0
    %668 = vmatpush2.msra.mxu0 0.0
    %669 = vmatprep.subr.mxu0 0.0
    %670 = vmatpush2.msra.mxu0 0.0
    %671 = vmatprep.subr.mxu0 0.0
    %672 = vmatpush2.msra.mxu0 0.0
    %673 = vmatprep.subr.mxu0 0.0
    %674 = vmatpush2.msra.mxu0 0.0
    %675 = vmatprep.subr.mxu0 0.0
    %676 = vmatpush2.msra.mxu0 0.0
    %677 = vmatprep.subr.mxu0 0.0
    %678 = vmatpush2.msra.mxu0 0.0
    %679 = vmatprep.subr.mxu0 0.0
    %680 = vmatpush2.msra.mxu0 0.0
    %681 = vmatprep.subr.mxu0 0.0
    %682 = vmatpush2.msra.mxu0 0.0
    %683 = vmatprep.mubr.f32.mxu0 0.0
    %684 = vmatmul.mubr.f32.gmra.mxu0 %v614
    %v685 = vpop.f32.mrf.mxu0
    %v686 = vadd.f32 %v610, %v685
    %v687 = vpop.f32.mrf.mxu0
    %688 = vdwg.mxu0
    %v689 = vld [vmem:[%s17] sm:$0xff]
    %691 = vset.pattern.permute.xlu0 0
    %692 = vperm.xlu0 %691, %v689
    %v693 = vpop.permute.xlu0 %692
    %v695 = vadd.f32 %v686, %v693
    %v696 = vmul.f32 %v695, %v98
    %697 = vadd.xlane.f32.xlu0 %v696
    %v698 = vpop.xlane.xlu0 %697
    %v699 = vmul.f32 %v698, 0.03125
    %v700 = vsub.f32 %v695, %v699
    %v701 = vmul.f32 %v700, %v98
    %v702 = vmul.f32 %v701, %v701
    %703 = vadd.xlane.f32.xlu0 %v702
    %v704 = vpop.xlane.xlu0 %703
    %v705 = vmul.f32 %v704, 0.03125
    %v706 = vld [vmem:[%s18] sm:$0xff]
    %v707 = vld [vmem:[%s19] sm:$0xff]
    %v708 = vadd.f32 %v705, 1e-05
    %v709 = vrsqrt.pop %v708
    %v710 = vmul.f32 %v706, %v709
    %v711 = vmul.f32 %v699, %v710
    %v712 = vsub.f32 %v707, %v711
    %714 = vset.pattern.permute.xlu0 0
    %715 = vperm.xlu0 %714, %v710
    %v716 = vpop.permute.xlu0 %715
    %v718 = vmul.f32 %v695, %v716
    %720 = vset.pattern.permute.xlu0 0
    %721 = vperm.xlu0 %720, %v712
    %v722 = vpop.permute.xlu0 %721
    %v724 = vadd.f32 %v718, %v722
    %v725 = vmax.f32 %v724, 0.0
    %v726 = vld [vmem:[%s20] sm:$0xff]
    %v727 = vld [vmem:[%s21] sm:$0xff]
    %v728 = vld [vmem:[%s22] sm:$0xff]
    %v729 = vld [vmem:[%s23] sm:$0xff]
    %730 = vrot.lane.b32.xlu0 %v725, 1
    %v731 = vpop.permute.xlu0 %730
    %v732 = vmul.f32 %v731, %v101
    %733 = vrot.lane.b32.xlu0 %v725, 127
    %v734 = vpop.permute.xlu0 %733
    %v735 = vmul.f32 %v734, %v104
    %v737 = vsel %vm262, %v726, 0
    %739 = vmatprep.subr.mxu0 0.0
    %740 = vmatpush1.msra.mxu0 0.0
    %741 = vmatprep.subr.mxu0 0.0
    %742 = vmatpush1.msra.mxu0 0.0
    %743 = vmatprep.subr.mxu0 0.0
    %744 = vmatpush1.msra.mxu0 0.0
    %745 = vmatprep.subr.mxu0 0.0
    %746 = vmatpush1.msra.mxu0 0.0
    %747 = vmatprep.subr.mxu0 0.0
    %748 = vmatpush1.msra.mxu0 0.0
    %749 = vmatprep.subr.mxu0 0.0
    %750 = vmatpush1.msra.mxu0 0.0
    %751 = vmatprep.subr.mxu0 0.0
    %752 = vmatpush1.msra.mxu0 0.0
    %753 = vmatprep.subr.mxu0 0.0
    %754 = vmatpush1.msra.mxu0 0.0
    %755 = vmatprep.subr.mxu0 0.0
    %756 = vmatpush1.msra.mxu0 0.0
    %757 = vmatprep.subr.mxu0 0.0
    %758 = vmatpush1.msra.mxu0 0.0
    %759 = vmatprep.subr.mxu0 0.0
    %760 = vmatpush1.msra.mxu0 0.0
    %761 = vmatprep.subr.mxu0 0.0
    %762 = vmatpush1.msra.mxu0 0.0
    %763 = vmatprep.subr.mxu0 0.0
    %764 = vmatpush1.msra.mxu0 0.0
    %765 = vmatprep.subr.mxu0 0.0
    %766 = vmatpush1.msra.mxu0 0.0
    %767 = vmatprep.subr.mxu0 0.0
    %768 = vmatpush1.msra.mxu0 0.0
    %769 = vmatprep.subr.mxu0 0.0
    %770 = vmatpush1.msra.mxu0 %v732
    %771 = vmatprep.subr.mxu0 0.0
    %772 = vmatpush2.msra.mxu0 0.0
    %773 = vmatprep.subr.mxu0 0.0
    %774 = vmatpush2.msra.mxu0 0.0
    %775 = vmatprep.subr.mxu0 0.0
    %776 = vmatpush2.msra.mxu0 0.0
    %777 = vmatprep.subr.mxu0 0.0
    %778 = vmatpush2.msra.mxu0 0.0
    %779 = vmatprep.subr.mxu0 0.0
    %780 = vmatpush2.msra.mxu0 0.0
    %781 = vmatprep.subr.mxu0 0.0
    %782 = vmatpush2.msra.mxu0 0.0
    %783 = vmatprep.subr.mxu0 0.0
    %784 = vmatpush2.msra.mxu0 0.0
    %785 = vmatprep.subr.mxu0 0.0
    %786 = vmatpush2.msra.mxu0 0.0
    %787 = vmatprep.subr.mxu0 0.0
    %788 = vmatpush2.msra.mxu0 0.0
    %789 = vmatprep.subr.mxu0 0.0
    %790 = vmatpush2.msra.mxu0 0.0
    %791 = vmatprep.subr.mxu0 0.0
    %792 = vmatpush2.msra.mxu0 0.0
    %793 = vmatprep.subr.mxu0 0.0
    %794 = vmatpush2.msra.mxu0 0.0
    %795 = vmatprep.subr.mxu0 0.0
    %796 = vmatpush2.msra.mxu0 0.0
    %797 = vmatprep.subr.mxu0 0.0
    %798 = vmatpush2.msra.mxu0 0.0
    %799 = vmatprep.subr.mxu0 0.0
    %800 = vmatpush2.msra.mxu0 0.0
    %801 = vmatprep.subr.mxu0 0.0
    %802 = vmatpush2.msra.mxu0 0.0
    %803 = vmatprep.mubr.f32.mxu0 0.0
    %804 = vmatmul.mubr.f32.gmra.mxu0 %v737
    %v805 = vpop.f32.mrf.mxu0
    %v806 = vadd.f32 0.0, %v805
    %v807 = vpop.f32.mrf.mxu0
    %808 = vdwg.mxu0
    %v810 = vsel %vm262, %v727, 0
    %812 = vmatprep.subr.mxu0 0.0
    %813 = vmatpush1.msra.mxu0 0.0
    %814 = vmatprep.subr.mxu0 0.0
    %815 = vmatpush1.msra.mxu0 0.0
    %816 = vmatprep.subr.mxu0 0.0
    %817 = vmatpush1.msra.mxu0 0.0
    %818 = vmatprep.subr.mxu0 0.0
    %819 = vmatpush1.msra.mxu0 0.0
    %820 = vmatprep.subr.mxu0 0.0
    %821 = vmatpush1.msra.mxu0 0.0
    %822 = vmatprep.subr.mxu0 0.0
    %823 = vmatpush1.msra.mxu0 0.0
    %824 = vmatprep.subr.mxu0 0.0
    %825 = vmatpush1.msra.mxu0 0.0
    %826 = vmatprep.subr.mxu0 0.0
    %827 = vmatpush1.msra.mxu0 0.0
    %828 = vmatprep.subr.mxu0 0.0
    %829 = vmatpush1.msra.mxu0 0.0
    %830 = vmatprep.subr.mxu0 0.0
    %831 = vmatpush1.msra.mxu0 0.0
    %832 = vmatprep.subr.mxu0 0.0
    %833 = vmatpush1.msra.mxu0 0.0
    %834 = vmatprep.subr.mxu0 0.0
    %835 = vmatpush1.msra.mxu0 0.0
    %836 = vmatprep.subr.mxu0 0.0
    %837 = vmatpush1.msra.mxu0 0.0
    %838 = vmatprep.subr.mxu0 0.0
    %839 = vmatpush1.msra.mxu0 0.0
    %840 = vmatprep.subr.mxu0 0.0
    %841 = vmatpush1.msra.mxu0 0.0
    %842 = vmatprep.subr.mxu0 0.0
    %843 = vmatpush1.msra.mxu0 %v725
    %844 = vmatprep.subr.mxu0 0.0
    %845 = vmatpush2.msra.mxu0 0.0
    %846 = vmatprep.subr.mxu0 0.0
    %847 = vmatpush2.msra.mxu0 0.0
    %848 = vmatprep.subr.mxu0 0.0
    %849 = vmatpush2.msra.mxu0 0.0
    %850 = vmatprep.subr.mxu0 0.0
    %851 = vmatpush2.msra.mxu0 0.0
    %852 = vmatprep.subr.mxu0 0.0
    %853 = vmatpush2.msra.mxu0 0.0
    %854 = vmatprep.subr.mxu0 0.0
    %855 = vmatpush2.msra.mxu0 0.0
    %856 = vmatprep.subr.mxu0 0.0
    %857 = vmatpush2.msra.mxu0 0.0
    %858 = vmatprep.subr.mxu0 0.0
    %859 = vmatpush2.msra.mxu0 0.0
    %860 = vmatprep.subr.mxu0 0.0
    %861 = vmatpush2.msra.mxu0 0.0
    %862 = vmatprep.subr.mxu0 0.0
    %863 = vmatpush2.msra.mxu0 0.0
    %864 = vmatprep.subr.mxu0 0.0
    %865 = vmatpush2.msra.mxu0 0.0
    %866 = vmatprep.subr.mxu0 0.0
    %867 = vmatpush2.msra.mxu0 0.0
    %868 = vmatprep.subr.mxu0 0.0
    %869 = vmatpush2.msra.mxu0 0.0
    %870 = vmatprep.subr.mxu0 0.0
    %871 = vmatpush2.msra.mxu0 0.0
    %872 = vmatprep.subr.mxu0 0.0
    %873 = vmatpush2.msra.mxu0 0.0
    %874 = vmatprep.subr.mxu0 0.0
    %875 = vmatpush2.msra.mxu0 0.0
    %876 = vmatprep.mubr.f32.mxu0 0.0
    %877 = vmatmul.mubr.f32.gmra.mxu0 %v810
    %v878 = vpop.f32.mrf.mxu0
    %v879 = vadd.f32 %v806, %v878
    %v880 = vpop.f32.mrf.mxu0
    %881 = vdwg.mxu0
    %v883 = vsel %vm262, %v728, 0
    %885 = vmatprep.subr.mxu0 0.0
    %886 = vmatpush1.msra.mxu0 0.0
    %887 = vmatprep.subr.mxu0 0.0
    %888 = vmatpush1.msra.mxu0 0.0
    %889 = vmatprep.subr.mxu0 0.0
    %890 = vmatpush1.msra.mxu0 0.0
    %891 = vmatprep.subr.mxu0 0.0
    %892 = vmatpush1.msra.mxu0 0.0
    %893 = vmatprep.subr.mxu0 0.0
    %894 = vmatpush1.msra.mxu0 0.0
    %895 = vmatprep.subr.mxu0 0.0
    %896 = vmatpush1.msra.mxu0 0.0
    %897 = vmatprep.subr.mxu0 0.0
    %898 = vmatpush1.msra.mxu0 0.0
    %899 = vmatprep.subr.mxu0 0.0
    %900 = vmatpush1.msra.mxu0 0.0
    %901 = vmatprep.subr.mxu0 0.0
    %902 = vmatpush1.msra.mxu0 0.0
    %903 = vmatprep.subr.mxu0 0.0
    %904 = vmatpush1.msra.mxu0 0.0
    %905 = vmatprep.subr.mxu0 0.0
    %906 = vmatpush1.msra.mxu0 0.0
    %907 = vmatprep.subr.mxu0 0.0
    %908 = vmatpush1.msra.mxu0 0.0
    %909 = vmatprep.subr.mxu0 0.0
    %910 = vmatpush1.msra.mxu0 0.0
    %911 = vmatprep.subr.mxu0 0.0
    %912 = vmatpush1.msra.mxu0 0.0
    %913 = vmatprep.subr.mxu0 0.0
    %914 = vmatpush1.msra.mxu0 0.0
    %915 = vmatprep.subr.mxu0 0.0
    %916 = vmatpush1.msra.mxu0 %v735
    %917 = vmatprep.subr.mxu0 0.0
    %918 = vmatpush2.msra.mxu0 0.0
    %919 = vmatprep.subr.mxu0 0.0
    %920 = vmatpush2.msra.mxu0 0.0
    %921 = vmatprep.subr.mxu0 0.0
    %922 = vmatpush2.msra.mxu0 0.0
    %923 = vmatprep.subr.mxu0 0.0
    %924 = vmatpush2.msra.mxu0 0.0
    %925 = vmatprep.subr.mxu0 0.0
    %926 = vmatpush2.msra.mxu0 0.0
    %927 = vmatprep.subr.mxu0 0.0
    %928 = vmatpush2.msra.mxu0 0.0
    %929 = vmatprep.subr.mxu0 0.0
    %930 = vmatpush2.msra.mxu0 0.0
    %931 = vmatprep.subr.mxu0 0.0
    %932 = vmatpush2.msra.mxu0 0.0
    %933 = vmatprep.subr.mxu0 0.0
    %934 = vmatpush2.msra.mxu0 0.0
    %935 = vmatprep.subr.mxu0 0.0
    %936 = vmatpush2.msra.mxu0 0.0
    %937 = vmatprep.subr.mxu0 0.0
    %938 = vmatpush2.msra.mxu0 0.0
    %939 = vmatprep.subr.mxu0 0.0
    %940 = vmatpush2.msra.mxu0 0.0
    %941 = vmatprep.subr.mxu0 0.0
    %942 = vmatpush2.msra.mxu0 0.0
    %943 = vmatprep.subr.mxu0 0.0
    %944 = vmatpush2.msra.mxu0 0.0
    %945 = vmatprep.subr.mxu0 0.0
    %946 = vmatpush2.msra.mxu0 0.0
    %947 = vmatprep.subr.mxu0 0.0
    %948 = vmatpush2.msra.mxu0 0.0
    %949 = vmatprep.mubr.f32.mxu0 0.0
    %950 = vmatmul.mubr.f32.gmra.mxu0 %v883
    %v951 = vpop.f32.mrf.mxu0
    %v952 = vadd.f32 0.0, %v951
    %v953 = vpop.f32.mrf.mxu0
    %954 = vdwg.mxu0
    %v955 = vadd.f32 %v879, %v952
    %957 = vset.pattern.permute.xlu0 0
    %958 = vperm.xlu0 %957, %v729
    %v959 = vpop.permute.xlu0 %958
    %v961 = vadd.f32 %v955, %v959
    %962 = vst [vmem:[#allocation4] sm:$0xff] %v961
    // Predicated region
    $region98: #{tpu_custom_call.1} parent=1 // pred_check
      _
    $region99: #{tpu_custom_call.1} parent=1 // pred_check_branch
      %964 = sbr.rel (0) target = $region101
    $region100: #{tpu_custom_call.1} parent=1 // pred_region
      %s966 = ssub.s32 128, 128
      %967 = vsyncadd [#allocation3], %s966
      %s969 = sshll.u32 [#allocation2], 4
      %s970 = int_to_ptr.vmem [resolvable:$true] %s969
      %972 = dma.vmem_to_hbm [thread:$0]  %s970, 128, %s24, [#allocation3]
    $region101: #{tpu_custom_call.1} parent=1 // pred_fallthru
      _
    // Predicated region
    $region102: #{tpu_custom_call.1} parent=1 // pred_check
      _
    $region103: #{tpu_custom_call.1} parent=1 // pred_check_branch
      %974 = sbr.rel (0) target = $region105
    $region104: #{tpu_custom_call.1} parent=1 // pred_region
      %s976 = ssub.s32 128, 128
      %977 = vsyncadd [#allocation5], %s976
      %s979 = sshll.u32 [#allocation4], 4
      %s980 = int_to_ptr.vmem [resolvable:$true] %s979
      %982 = dma.vmem_to_hbm [thread:$0]  %s980, 128, %s25, [#allocation5]
    $region105: #{tpu_custom_call.1} parent=1 // pred_fallthru
      _
    // Predicated region
    $region106: #{tpu_custom_call.1} parent=1 // pred_check
      _
    $region107: #{tpu_custom_call.1} parent=1 // pred_check_branch
      %984 = sbr.rel (0) target = $region109
    $region108: #{tpu_custom_call.1} parent=1 // pred_region
      %985 = dma.done [#allocation3], 128
    $region109: #{tpu_custom_call.1} parent=1 // pred_fallthru
      _
    // Predicated region
    $region110: #{tpu_custom_call.1} parent=1 // pred_check
      _
    $region111: #{tpu_custom_call.1} parent=1 // pred_check_branch
      %987 = sbr.rel (0) target = $region113
    $region112: #{tpu_custom_call.1} parent=1 // pred_region
      %988 = dma.done [#allocation5], 128
    $region113: #{tpu_custom_call.1} parent=1 // pred_fallthru
      _
    %989 = vsyncpa [#allocation3], 1
    %990 = vsyncpa [#allocation5], 1

</llo_original>
